<compile_context>
chip_gen: v7x
topology: tpu7x:2x2x1
jax: 0.10.0
libtpu: 0.0.40
codegen_flags: <defaults>
</compile_context>

<pallas_src>
import functools

import jax
import jax.numpy as jnp
from jax import lax
from jax.experimental import pallas as pl
from jax.experimental.pallas import tpu as pltpu


def _round_up(x, m):
    return (x + m - 1) // m * m


def _lstm_recurrence_kernel(gx_ref, h0_ref, c0_ref, whh_ref, h_out_ref,
                            h_sc, c_sc):
    """Serial LSTM recurrence over one chunk of timesteps.

    gx_ref:   (TB, B, 4*Hp)  precomputed x_t @ W_ih^T + (b_ih + b_hh)
    h0/c0:    (B, Hp)        initial state (used only on the first chunk)
    whh_ref:  (Hp, 4*Hp)     recurrent weights, gate-blocked & lane aligned
    h_out:    (TB, B, Hp)    hidden state per timestep (projection is outside)
    h_sc/c_sc:(B, Hp)        f32 carries, persistent across grid steps
    """
    chunk = pl.program_id(0)

    @pl.when(chunk == 0)
    def _():
        h_sc[...] = h0_ref[...]
        c_sc[...] = c0_ref[...]

    tb = gx_ref.shape[0]          # static chunk length
    hp = h_sc.shape[-1]           # padded hidden size (multiple of 128)

    def step(j, carry):
        h = h_sc[...]
        c = c_sc[...]
        # Only the recurrent matmul remains inside the serial loop; the input
        # projection was hoisted into one large matmul in the wrapper.
        gates = gx_ref[j] + jnp.dot(
            h.astype(whh_ref.dtype), whh_ref[...],
            preferred_element_type=jnp.float32)
        # Gate slices are whole lane tiles because hp % 128 == 0.
        i_g = jax.nn.sigmoid(gates[:, 0 * hp:1 * hp])
        f_g = jax.nn.sigmoid(gates[:, 1 * hp:2 * hp])
        g_g = jnp.tanh(gates[:, 2 * hp:3 * hp])
        o_g = jax.nn.sigmoid(gates[:, 3 * hp:4 * hp])
        c_new = f_g * c + i_g * g_g
        h_new = o_g * jnp.tanh(c_new)
        h_sc[...] = h_new
        c_sc[...] = c_new
        h_out_ref[j] = h_new.astype(h_out_ref.dtype)
        return carry

    lax.fori_loop(0, tb, step, 0, unroll=True)


def lstm_decode(tgt, hidden, cell, params, max_len=None, time_chunk=16,
                matmul_dtype=jnp.float32):
    """Pallas implementation of LatentOptimizeLSTM.forward.

    tgt:    [B, T, D] float32   (batch-first, PyTorch convention)
    hidden: [1, B, H] float32   (the module's nn.Parameter hidden state)
    cell:   [1, B, H] float32   (the module's nn.Parameter cell state)
    returns [B, T, V] float32
    """
    if max_len is not None:
        tgt = tgt[:, :max_len, :]     # NOTE: max_len must be a static int
    B, T, D = tgt.shape
    H = hidden.shape[-1]
    V = params["b_out"].shape[-1]

    f32 = jnp.float32
    # ---- Lane-align hidden / gate dims (Hp multiple of 128) -----------------
    Hp = _round_up(H, 128)
    Gp = 4 * Hp

    w_ih = params["w_ih"].astype(f32).reshape(4, H, D)
    w_hh = params["w_hh"].astype(f32).reshape(4, H, H)
    bias = (params["b_ih"] + params["b_hh"]).astype(f32).reshape(4, H)

    w_ih_p = jnp.zeros((4, Hp, D), f32).at[:, :H, :].set(w_ih)
    w_hh_p = jnp.zeros((4, Hp, Hp), f32).at[:, :H, :H].set(w_hh)
    bias_p = jnp.zeros((4, Hp), f32).at[:, :H].set(bias)

    # whh_t[in, g*Hp + out] = W_hh[g, out, in]  -> gate-blocked, lane aligned
    wih_t = jnp.transpose(w_ih_p, (2, 0, 1)).reshape(D, Gp)     # [D,  4Hp]
    whh_t = jnp.transpose(w_hh_p, (2, 0, 1)).reshape(Hp, Gp)    # [Hp, 4Hp]
    bias_flat = bias_p.reshape(Gp)

    # ---- Hoisted input projection: one big matmul over all timesteps --------
    gates_x = (jnp.einsum('btd,dg->tbg',
                          tgt.astype(matmul_dtype), wih_t.astype(matmul_dtype),
                          preferred_element_type=f32)
               + bias_flat)                                     # [T, B, 4Hp]

    h0 = jnp.zeros((B, Hp), f32).at[:, :H].set(hidden[0].astype(f32))
    c0 = jnp.zeros((B, Hp), f32).at[:, :H].set(cell[0].astype(f32))

    # ---- Chunk TB timesteps per grid step -----------------------------------
    TB = max(1, min(time_chunk, T))
    Tp = _round_up(T, TB)
    if Tp != T:
        gates_x = jnp.pad(gates_x, ((0, Tp - T), (0, 0), (0, 0)))

    h_all = pl.pallas_call(
        _lstm_recurrence_kernel,
        out_shape=jax.ShapeDtypeStruct((Tp, B, Hp), f32),
        grid_spec=pltpu.PrefetchScalarGridSpec(
            num_scalar_prefetch=0,
            grid=(Tp // TB,),
            in_specs=[
                pl.BlockSpec((TB, B, Gp), lambda t: (t, 0, 0)),   # gates_x
                pl.BlockSpec((B, Hp), lambda t: (0, 0)),          # h0
                pl.BlockSpec((B, Hp), lambda t: (0, 0)),          # c0
                pl.BlockSpec((Hp, Gp), lambda t: (0, 0)),         # W_hh^T
            ],
            out_specs=pl.BlockSpec((TB, B, Hp), lambda t: (t, 0, 0)),
            scratch_shapes=[
                pltpu.VMEM((B, Hp), f32),   # h carry
                pltpu.VMEM((B, Hp), f32),   # c carry
            ],
        ),
        compiler_params=pltpu.CompilerParams(
            dimension_semantics=("arbitrary",),    # recurrent over time
        ),
        # TODO(synk): for large H the resident [Hp, 4Hp] W_hh tile should be
        #             split over an extra gate grid axis and vmem_limit_bytes
        #             raised explicitly (v7x has only 64 MiB VMEM).
    )(gates_x, h0, c0, whh_t.astype(matmul_dtype))

    # ---- Hoisted output projection: one big matmul over all timesteps -------
    w_out_p = jnp.zeros((Hp, V), f32).at[:H, :].set(
        params["w_out"].astype(f32).T)
    out = (jnp.einsum('tbh,hv->btv', h_all[:T], w_out_p,
                      preferred_element_type=f32)
           + params["b_out"].astype(f32))
    return out


def _ref_decode(tgt, hidden, cell, params):
    """Pure-JAX reference (torch.nn.LSTM semantics) for correctness check."""
    wih_t = params["w_ih"].T
    whh_t = params["w_hh"].T
    bih = params["b_ih"]
    bhh = params["b_hh"]
    wout_t = params["w_out"].T
    bout = params["b_out"]
    H = hidden.shape[-1]

    def step(carry, x_t):
        h, c = carry
        gates = x_t @ wih_t + h @ whh_t + bih + bhh
        i_g = jax.nn.sigmoid(gates[:, 0 * H:1 * H])
        f_g = jax.nn.sigmoid(gates[:, 1 * H:2 * H])
        g_g = jnp.tanh(gates[:, 2 * H:3 * H])
        o_g = jax.nn.sigmoid(gates[:, 3 * H:4 * H])
        c_new = f_g * c + i_g * g_g
        h_new = o_g * jnp.tanh(c_new)
        return (h_new, c_new), h_new @ wout_t + bout

    x_tm = jnp.transpose(tgt, (1, 0, 2))
    _, out_tm = jax.lax.scan(step, (hidden[0], cell[0]), x_tm)
    return jnp.transpose(out_tm, (1, 0, 2))


if __name__ == "__main__":
    B, T, D, H, V = 2, 8, 16, 32, 16

    key = jax.random.PRNGKey(0)
    keys = jax.random.split(key, 9)
    scale = 0.1
    params = {
        "w_ih": scale * jax.random.normal(keys[0], (4 * H, D), jnp.float32),
        "w_hh": scale * jax.random.normal(keys[1], (4 * H, H), jnp.float32),
        "b_ih": scale * jax.random.normal(keys[2], (4 * H,), jnp.float32),
        "b_hh": scale * jax.random.normal(keys[3], (4 * H,), jnp.float32),
        "w_out": scale * jax.random.normal(keys[4], (V, H), jnp.float32),
        "b_out": scale * jax.random.normal(keys[5], (V,), jnp.float32),
    }

    tgt = jax.random.normal(keys[6], (B, T, D), jnp.float32)
    # These play the role of the module's nn.Parameter hidden / cell states.
    hidden = jax.random.normal(keys[7], (1, B, H), jnp.float32)
    cell = jax.random.normal(keys[8], (1, B, H), jnp.float32)

    decode = jax.jit(functools.partial(lstm_decode, max_len=T, time_chunk=8))
    out = decode(tgt, hidden, cell, params)
    out = jax.block_until_ready(out)

    ref = _ref_decode(tgt, hidden, cell, params)
    assert out.shape == (B, T, V)
    assert jnp.allclose(out, ref, atol=1e-4, rtol=1e-4)

    print("KERNEL_OK")
</pallas_src>

<mosaic_0001>
module attributes {stable_mosaic.version = 11 : i64} {
  func.func @_lstm_recurrence_kernel(%arg0: i32, %arg1: memref<8x2x512xf32, #tpu.memory_space<vmem>>, %arg2: memref<2x128xf32, #tpu.memory_space<vmem>>, %arg3: memref<2x128xf32, #tpu.memory_space<vmem>>, %arg4: memref<128x512xf32, #tpu.memory_space<vmem>>, %arg5: memref<8x2x128xf32, #tpu.memory_space<vmem>>, %arg6: memref<2x128xf32, #tpu.memory_space<vmem>>, %arg7: memref<2x128xf32, #tpu.memory_space<vmem>>) attributes {dimension_semantics = [#tpu.dimension_semantics<arbitrary>], iteration_bounds = array<i64: 1>, scalar_prefetch = 0 : i64, scratch_operands = 2 : i64, tpu.core_type = #tpu.core_type<tc>, window_params = [{transform_indices = @transform_0, window_bounds = array<i64: 8, 2, 512>}, {pipeline_mode = #tpu.pipeline_mode<synchronous>, transform_indices = @transform_1, window_bounds = array<i64: 2, 128>}, {pipeline_mode = #tpu.pipeline_mode<synchronous>, transform_indices = @transform_2, window_bounds = array<i64: 2, 128>}, {pipeline_mode = #tpu.pipeline_mode<synchronous>, transform_indices = @transform_3, window_bounds = array<i64: 128, 512>}, {transform_indices = @transform_4, window_bounds = array<i64: 8, 2, 128>}]} {
    %c0_i32 = arith.constant 0 : i32
    %0 = arith.cmpi eq, %arg0, %c0_i32 : i32
    %1 = arith.extui %0 : i1 to i32
    %c0_i32_0 = arith.constant 0 : i32
    %2 = arith.cmpi ne, %1, %c0_i32_0 : i32
    scf.if %2 {
      %c0_144 = arith.constant 0 : index
      %c0_145 = arith.constant 0 : index
      %315 = vector.load %arg2[%c0_144, %c0_145] : memref<2x128xf32, #tpu.memory_space<vmem>>, vector<2x128xf32>
      %c0_146 = arith.constant 0 : index
      %c0_147 = arith.constant 0 : index
      %316 = vector.load %arg6[%c0_146, %c0_147] : memref<2x128xf32, #tpu.memory_space<vmem>>, vector<2x128xf32>
      tpu.vector_store %arg6[%c0_146, %c0_147], %315 {strides = array<i32>} : memref<2x128xf32, #tpu.memory_space<vmem>>, vector<2x128xf32>,
      %c0_148 = arith.constant 0 : index
      %c0_149 = arith.constant 0 : index
      %317 = vector.load %arg3[%c0_148, %c0_149] : memref<2x128xf32, #tpu.memory_space<vmem>>, vector<2x128xf32>
      %c0_150 = arith.constant 0 : index
      %c0_151 = arith.constant 0 : index
      %318 = vector.load %arg7[%c0_150, %c0_151] : memref<2x128xf32, #tpu.memory_space<vmem>>, vector<2x128xf32>
      tpu.vector_store %arg7[%c0_150, %c0_151], %317 {strides = array<i32>} : memref<2x128xf32, #tpu.memory_space<vmem>>, vector<2x128xf32>,
    } else {
    }
    %c0_i32_1 = arith.constant 0 : i32
    %c0 = arith.constant 0 : index
    %c0_2 = arith.constant 0 : index
    %3 = vector.load %arg6[%c0, %c0_2] : memref<2x128xf32, #tpu.memory_space<vmem>>, vector<2x128xf32>
    %c0_3 = arith.constant 0 : index
    %c0_4 = arith.constant 0 : index
    %4 = vector.load %arg7[%c0_3, %c0_4] : memref<2x128xf32, #tpu.memory_space<vmem>>, vector<2x128xf32>
    %5 = arith.index_cast %c0_i32_1 : i32 to index
    %c0_5 = arith.constant 0 : index
    %c0_6 = arith.constant 0 : index
    %6 = vector.load %arg1[%5, %c0_5, %c0_6] : memref<8x2x512xf32, #tpu.memory_space<vmem>>, vector<1x2x512xf32>
    %7 = vector.shape_cast %6 : vector<1x2x512xf32> to vector<2x512xf32>
    %c0_7 = arith.constant 0 : index
    %c0_8 = arith.constant 0 : index
    %8 = vector.load %arg4[%c0_7, %c0_8] : memref<128x512xf32, #tpu.memory_space<vmem>>, vector<128x512xf32>
    %cst = arith.constant dense<0.000000e+00> : vector<2x512xf32>
    %9 = tpu.matmul %3, %8, %cst {dimension_numbers = #tpu.dot_dimension_numbers<[1], [0], [0], [1], [0, 0, 1, 1], [], []>} : vector<2x128xf32>, vector<128x512xf32>, vector<2x512xf32> -> vector<2x512xf32>
    %10 = arith.addf %7, %9 : vector<2x512xf32>
    %11 = vector.extract_strided_slice %10 {offsets = [0, 0], sizes = [2, 128], strides = [1, 1]} : vector<2x512xf32> to vector<2x128xf32>
    %12 = arith.negf %11 : vector<2x128xf32>
    %13 = math.exp %12 : vector<2x128xf32>
    %cst_9 = arith.constant 1.000000e+00 : f32
    %14 = vector.broadcast %cst_9 : f32 to vector<2x128xf32>
    %15 = arith.addf %14, %13 : vector<2x128xf32>
    %16 = arith.divf %14, %15 : vector<2x128xf32>
    %17 = vector.extract_strided_slice %10 {offsets = [0, 128], sizes = [2, 128], strides = [1, 1]} : vector<2x512xf32> to vector<2x128xf32>
    %18 = arith.negf %17 : vector<2x128xf32>
    %19 = math.exp %18 : vector<2x128xf32>
    %cst_10 = arith.constant 1.000000e+00 : f32
    %20 = vector.broadcast %cst_10 : f32 to vector<2x128xf32>
    %21 = arith.addf %20, %19 : vector<2x128xf32>
    %22 = arith.divf %20, %21 : vector<2x128xf32>
    %23 = vector.extract_strided_slice %10 {offsets = [0, 256], sizes = [2, 128], strides = [1, 1]} : vector<2x512xf32> to vector<2x128xf32>
    %24 = math.tanh %23 : vector<2x128xf32>
    %25 = vector.extract_strided_slice %10 {offsets = [0, 384], sizes = [2, 128], strides = [1, 1]} : vector<2x512xf32> to vector<2x128xf32>
    %26 = arith.negf %25 : vector<2x128xf32>
    %27 = math.exp %26 : vector<2x128xf32>
    %cst_11 = arith.constant 1.000000e+00 : f32
    %28 = vector.broadcast %cst_11 : f32 to vector<2x128xf32>
    %29 = arith.addf %28, %27 : vector<2x128xf32>
    %30 = arith.divf %28, %29 : vector<2x128xf32>
    %31 = arith.mulf %22, %4 : vector<2x128xf32>
    %32 = arith.mulf %16, %24 : vector<2x128xf32>
    %33 = arith.addf %31, %32 : vector<2x128xf32>
    %34 = math.tanh %33 : vector<2x128xf32>
    %35 = arith.mulf %30, %34 : vector<2x128xf32>
    %c0_12 = arith.constant 0 : index
    %c0_13 = arith.constant 0 : index
    %36 = vector.load %arg6[%c0_12, %c0_13] : memref<2x128xf32, #tpu.memory_space<vmem>>, vector<2x128xf32>
    tpu.vector_store %arg6[%c0_12, %c0_13], %35 {strides = array<i32>} : memref<2x128xf32, #tpu.memory_space<vmem>>, vector<2x128xf32>,
    %c0_14 = arith.constant 0 : index
    %c0_15 = arith.constant 0 : index
    %37 = vector.load %arg7[%c0_14, %c0_15] : memref<2x128xf32, #tpu.memory_space<vmem>>, vector<2x128xf32>
    tpu.vector_store %arg7[%c0_14, %c0_15], %33 {strides = array<i32>} : memref<2x128xf32, #tpu.memory_space<vmem>>, vector<2x128xf32>,
    %38 = arith.index_cast %c0_i32_1 : i32 to index
    %c0_16 = arith.constant 0 : index
    %c0_17 = arith.constant 0 : index
    %39 = vector.load %arg5[%38, %c0_16, %c0_17] : memref<8x2x128xf32, #tpu.memory_space<vmem>>, vector<1x2x128xf32>
    %40 = vector.shape_cast %39 : vector<1x2x128xf32> to vector<2x128xf32>
    %41 = vector.shape_cast %35 : vector<2x128xf32> to vector<1x2x128xf32>
    tpu.vector_store %arg5[%38, %c0_16, %c0_17], %41 {strides = array<i32>} : memref<8x2x128xf32, #tpu.memory_space<vmem>>, vector<1x2x128xf32>,
    %c1_i32 = arith.constant 1 : i32
    %c0_18 = arith.constant 0 : index
    %c0_19 = arith.constant 0 : index
    %42 = vector.load %arg6[%c0_18, %c0_19] : memref<2x128xf32, #tpu.memory_space<vmem>>, vector<2x128xf32>
    %c0_20 = arith.constant 0 : index
    %c0_21 = arith.constant 0 : index
    %43 = vector.load %arg7[%c0_20, %c0_21] : memref<2x128xf32, #tpu.memory_space<vmem>>, vector<2x128xf32>
    %44 = arith.index_cast %c1_i32 : i32 to index
    %c0_22 = arith.constant 0 : index
    %c0_23 = arith.constant 0 : index
    %45 = vector.load %arg1[%44, %c0_22, %c0_23] : memref<8x2x512xf32, #tpu.memory_space<vmem>>, vector<1x2x512xf32>
    %46 = vector.shape_cast %45 : vector<1x2x512xf32> to vector<2x512xf32>
    %c0_24 = arith.constant 0 : index
    %c0_25 = arith.constant 0 : index
    %47 = vector.load %arg4[%c0_24, %c0_25] : memref<128x512xf32, #tpu.memory_space<vmem>>, vector<128x512xf32>
    %cst_26 = arith.constant dense<0.000000e+00> : vector<2x512xf32>
    %48 = tpu.matmul %42, %47, %cst_26 {dimension_numbers = #tpu.dot_dimension_numbers<[1], [0], [0], [1], [0, 0, 1, 1], [], []>} : vector<2x128xf32>, vector<128x512xf32>, vector<2x512xf32> -> vector<2x512xf32>
    %49 = arith.addf %46, %48 : vector<2x512xf32>
    %50 = vector.extract_strided_slice %49 {offsets = [0, 0], sizes = [2, 128], strides = [1, 1]} : vector<2x512xf32> to vector<2x128xf32>
    %51 = arith.negf %50 : vector<2x128xf32>
    %52 = math.exp %51 : vector<2x128xf32>
    %cst_27 = arith.constant 1.000000e+00 : f32
    %53 = vector.broadcast %cst_27 : f32 to vector<2x128xf32>
    %54 = arith.addf %53, %52 : vector<2x128xf32>
    %55 = arith.divf %53, %54 : vector<2x128xf32>
    %56 = vector.extract_strided_slice %49 {offsets = [0, 128], sizes = [2, 128], strides = [1, 1]} : vector<2x512xf32> to vector<2x128xf32>
    %57 = arith.negf %56 : vector<2x128xf32>
    %58 = math.exp %57 : vector<2x128xf32>
    %cst_28 = arith.constant 1.000000e+00 : f32
    %59 = vector.broadcast %cst_28 : f32 to vector<2x128xf32>
    %60 = arith.addf %59, %58 : vector<2x128xf32>
    %61 = arith.divf %59, %60 : vector<2x128xf32>
    %62 = vector.extract_strided_slice %49 {offsets = [0, 256], sizes = [2, 128], strides = [1, 1]} : vector<2x512xf32> to vector<2x128xf32>
    %63 = math.tanh %62 : vector<2x128xf32>
    %64 = vector.extract_strided_slice %49 {offsets = [0, 384], sizes = [2, 128], strides = [1, 1]} : vector<2x512xf32> to vector<2x128xf32>
    %65 = arith.negf %64 : vector<2x128xf32>
    %66 = math.exp %65 : vector<2x128xf32>
    %cst_29 = arith.constant 1.000000e+00 : f32
    %67 = vector.broadcast %cst_29 : f32 to vector<2x128xf32>
    %68 = arith.addf %67, %66 : vector<2x128xf32>
    %69 = arith.divf %67, %68 : vector<2x128xf32>
    %70 = arith.mulf %61, %43 : vector<2x128xf32>
    %71 = arith.mulf %55, %63 : vector<2x128xf32>
    %72 = arith.addf %70, %71 : vector<2x128xf32>
    %73 = math.tanh %72 : vector<2x128xf32>
    %74 = arith.mulf %69, %73 : vector<2x128xf32>
    %c0_30 = arith.constant 0 : index
    %c0_31 = arith.constant 0 : index
    %75 = vector.load %arg6[%c0_30, %c0_31] : memref<2x128xf32, #tpu.memory_space<vmem>>, vector<2x128xf32>
    tpu.vector_store %arg6[%c0_30, %c0_31], %74 {strides = array<i32>} : memref<2x128xf32, #tpu.memory_space<vmem>>, vector<2x128xf32>,
    %c0_32 = arith.constant 0 : index
    %c0_33 = arith.constant 0 : index
    %76 = vector.load %arg7[%c0_32, %c0_33] : memref<2x128xf32, #tpu.memory_space<vmem>>, vector<2x128xf32>
    tpu.vector_store %arg7[%c0_32, %c0_33], %72 {strides = array<i32>} : memref<2x128xf32, #tpu.memory_space<vmem>>, vector<2x128xf32>,
    %77 = arith.index_cast %c1_i32 : i32 to index
    %c0_34 = arith.constant 0 : index
    %c0_35 = arith.constant 0 : index
    %78 = vector.load %arg5[%77, %c0_34, %c0_35] : memref<8x2x128xf32, #tpu.memory_space<vmem>>, vector<1x2x128xf32>
    %79 = vector.shape_cast %78 : vector<1x2x128xf32> to vector<2x128xf32>
    %80 = vector.shape_cast %74 : vector<2x128xf32> to vector<1x2x128xf32>
    tpu.vector_store %arg5[%77, %c0_34, %c0_35], %80 {strides = array<i32>} : memref<8x2x128xf32, #tpu.memory_space<vmem>>, vector<1x2x128xf32>,
    %c2_i32 = arith.constant 2 : i32
    %c0_36 = arith.constant 0 : index
    %c0_37 = arith.constant 0 : index
    %81 = vector.load %arg6[%c0_36, %c0_37] : memref<2x128xf32, #tpu.memory_space<vmem>>, vector<2x128xf32>
    %c0_38 = arith.constant 0 : index
    %c0_39 = arith.constant 0 : index
    %82 = vector.load %arg7[%c0_38, %c0_39] : memref<2x128xf32, #tpu.memory_space<vmem>>, vector<2x128xf32>
    %83 = arith.index_cast %c2_i32 : i32 to index
    %c0_40 = arith.constant 0 : index
    %c0_41 = arith.constant 0 : index
    %84 = vector.load %arg1[%83, %c0_40, %c0_41] : memref<8x2x512xf32, #tpu.memory_space<vmem>>, vector<1x2x512xf32>
    %85 = vector.shape_cast %84 : vector<1x2x512xf32> to vector<2x512xf32>
    %c0_42 = arith.constant 0 : index
    %c0_43 = arith.constant 0 : index
    %86 = vector.load %arg4[%c0_42, %c0_43] : memref<128x512xf32, #tpu.memory_space<vmem>>, vector<128x512xf32>
    %cst_44 = arith.constant dense<0.000000e+00> : vector<2x512xf32>
    %87 = tpu.matmul %81, %86, %cst_44 {dimension_numbers = #tpu.dot_dimension_numbers<[1], [0], [0], [1], [0, 0, 1, 1], [], []>} : vector<2x128xf32>, vector<128x512xf32>, vector<2x512xf32> -> vector<2x512xf32>
    %88 = arith.addf %85, %87 : vector<2x512xf32>
    %89 = vector.extract_strided_slice %88 {offsets = [0, 0], sizes = [2, 128], strides = [1, 1]} : vector<2x512xf32> to vector<2x128xf32>
    %90 = arith.negf %89 : vector<2x128xf32>
    %91 = math.exp %90 : vector<2x128xf32>
    %cst_45 = arith.constant 1.000000e+00 : f32
    %92 = vector.broadcast %cst_45 : f32 to vector<2x128xf32>
    %93 = arith.addf %92, %91 : vector<2x128xf32>
    %94 = arith.divf %92, %93 : vector<2x128xf32>
    %95 = vector.extract_strided_slice %88 {offsets = [0, 128], sizes = [2, 128], strides = [1, 1]} : vector<2x512xf32> to vector<2x128xf32>
    %96 = arith.negf %95 : vector<2x128xf32>
    %97 = math.exp %96 : vector<2x128xf32>
    %cst_46 = arith.constant 1.000000e+00 : f32
    %98 = vector.broadcast %cst_46 : f32 to vector<2x128xf32>
    %99 = arith.addf %98, %97 : vector<2x128xf32>
    %100 = arith.divf %98, %99 : vector<2x128xf32>
    %101 = vector.extract_strided_slice %88 {offsets = [0, 256], sizes = [2, 128], strides = [1, 1]} : vector<2x512xf32> to vector<2x128xf32>
    %102 = math.tanh %101 : vector<2x128xf32>
    %103 = vector.extract_strided_slice %88 {offsets = [0, 384], sizes = [2, 128], strides = [1, 1]} : vector<2x512xf32> to vector<2x128xf32>
    %104 = arith.negf %103 : vector<2x128xf32>
    %105 = math.exp %104 : vector<2x128xf32>
    %cst_47 = arith.constant 1.000000e+00 : f32
    %106 = vector.broadcast %cst_47 : f32 to vector<2x128xf32>
    %107 = arith.addf %106, %105 : vector<2x128xf32>
    %108 = arith.divf %106, %107 : vector<2x128xf32>
    %109 = arith.mulf %100, %82 : vector<2x128xf32>
    %110 = arith.mulf %94, %102 : vector<2x128xf32>
    %111 = arith.addf %109, %110 : vector<2x128xf32>
    %112 = math.tanh %111 : vector<2x128xf32>
    %113 = arith.mulf %108, %112 : vector<2x128xf32>
    %c0_48 = arith.constant 0 : index
    %c0_49 = arith.constant 0 : index
    %114 = vector.load %arg6[%c0_48, %c0_49] : memref<2x128xf32, #tpu.memory_space<vmem>>, vector<2x128xf32>
    tpu.vector_store %arg6[%c0_48, %c0_49], %113 {strides = array<i32>} : memref<2x128xf32, #tpu.memory_space<vmem>>, vector<2x128xf32>,
    %c0_50 = arith.constant 0 : index
    %c0_51 = arith.constant 0 : index
    %115 = vector.load %arg7[%c0_50, %c0_51] : memref<2x128xf32, #tpu.memory_space<vmem>>, vector<2x128xf32>
    tpu.vector_store %arg7[%c0_50, %c0_51], %111 {strides = array<i32>} : memref<2x128xf32, #tpu.memory_space<vmem>>, vector<2x128xf32>,
    %116 = arith.index_cast %c2_i32 : i32 to index
    %c0_52 = arith.constant 0 : index
    %c0_53 = arith.constant 0 : index
    %117 = vector.load %arg5[%116, %c0_52, %c0_53] : memref<8x2x128xf32, #tpu.memory_space<vmem>>, vector<1x2x128xf32>
    %118 = vector.shape_cast %117 : vector<1x2x128xf32> to vector<2x128xf32>
    %119 = vector.shape_cast %113 : vector<2x128xf32> to vector<1x2x128xf32>
    tpu.vector_store %arg5[%116, %c0_52, %c0_53], %119 {strides = array<i32>} : memref<8x2x128xf32, #tpu.memory_space<vmem>>, vector<1x2x128xf32>,
    %c3_i32 = arith.constant 3 : i32
    %c0_54 = arith.constant 0 : index
    %c0_55 = arith.constant 0 : index
    %120 = vector.load %arg6[%c0_54, %c0_55] : memref<2x128xf32, #tpu.memory_space<vmem>>, vector<2x128xf32>
    %c0_56 = arith.constant 0 : index
    %c0_57 = arith.constant 0 : index
    %121 = vector.load %arg7[%c0_56, %c0_57] : memref<2x128xf32, #tpu.memory_space<vmem>>, vector<2x128xf32>
    %122 = arith.index_cast %c3_i32 : i32 to index
    %c0_58 = arith.constant 0 : index
    %c0_59 = arith.constant 0 : index
    %123 = vector.load %arg1[%122, %c0_58, %c0_59] : memref<8x2x512xf32, #tpu.memory_space<vmem>>, vector<1x2x512xf32>
    %124 = vector.shape_cast %123 : vector<1x2x512xf32> to vector<2x512xf32>
    %c0_60 = arith.constant 0 : index
    %c0_61 = arith.constant 0 : index
    %125 = vector.load %arg4[%c0_60, %c0_61] : memref<128x512xf32, #tpu.memory_space<vmem>>, vector<128x512xf32>
    %cst_62 = arith.constant dense<0.000000e+00> : vector<2x512xf32>
    %126 = tpu.matmul %120, %125, %cst_62 {dimension_numbers = #tpu.dot_dimension_numbers<[1], [0], [0], [1], [0, 0, 1, 1], [], []>} : vector<2x128xf32>, vector<128x512xf32>, vector<2x512xf32> -> vector<2x512xf32>
    %127 = arith.addf %124, %126 : vector<2x512xf32>
    %128 = vector.extract_strided_slice %127 {offsets = [0, 0], sizes = [2, 128], strides = [1, 1]} : vector<2x512xf32> to vector<2x128xf32>
    %129 = arith.negf %128 : vector<2x128xf32>
    %130 = math.exp %129 : vector<2x128xf32>
    %cst_63 = arith.constant 1.000000e+00 : f32
    %131 = vector.broadcast %cst_63 : f32 to vector<2x128xf32>
    %132 = arith.addf %131, %130 : vector<2x128xf32>
    %133 = arith.divf %131, %132 : vector<2x128xf32>
    %134 = vector.extract_strided_slice %127 {offsets = [0, 128], sizes = [2, 128], strides = [1, 1]} : vector<2x512xf32> to vector<2x128xf32>
    %135 = arith.negf %134 : vector<2x128xf32>
    %136 = math.exp %135 : vector<2x128xf32>
    %cst_64 = arith.constant 1.000000e+00 : f32
    %137 = vector.broadcast %cst_64 : f32 to vector<2x128xf32>
    %138 = arith.addf %137, %136 : vector<2x128xf32>
    %139 = arith.divf %137, %138 : vector<2x128xf32>
    %140 = vector.extract_strided_slice %127 {offsets = [0, 256], sizes = [2, 128], strides = [1, 1]} : vector<2x512xf32> to vector<2x128xf32>
    %141 = math.tanh %140 : vector<2x128xf32>
    %142 = vector.extract_strided_slice %127 {offsets = [0, 384], sizes = [2, 128], strides = [1, 1]} : vector<2x512xf32> to vector<2x128xf32>
    %143 = arith.negf %142 : vector<2x128xf32>
    %144 = math.exp %143 : vector<2x128xf32>
    %cst_65 = arith.constant 1.000000e+00 : f32
    %145 = vector.broadcast %cst_65 : f32 to vector<2x128xf32>
    %146 = arith.addf %145, %144 : vector<2x128xf32>
    %147 = arith.divf %145, %146 : vector<2x128xf32>
    %148 = arith.mulf %139, %121 : vector<2x128xf32>
    %149 = arith.mulf %133, %141 : vector<2x128xf32>
    %150 = arith.addf %148, %149 : vector<2x128xf32>
    %151 = math.tanh %150 : vector<2x128xf32>
    %152 = arith.mulf %147, %151 : vector<2x128xf32>
    %c0_66 = arith.constant 0 : index
    %c0_67 = arith.constant 0 : index
    %153 = vector.load %arg6[%c0_66, %c0_67] : memref<2x128xf32, #tpu.memory_space<vmem>>, vector<2x128xf32>
    tpu.vector_store %arg6[%c0_66, %c0_67], %152 {strides = array<i32>} : memref<2x128xf32, #tpu.memory_space<vmem>>, vector<2x128xf32>,
    %c0_68 = arith.constant 0 : index
    %c0_69 = arith.constant 0 : index
    %154 = vector.load %arg7[%c0_68, %c0_69] : memref<2x128xf32, #tpu.memory_space<vmem>>, vector<2x128xf32>
    tpu.vector_store %arg7[%c0_68, %c0_69], %150 {strides = array<i32>} : memref<2x128xf32, #tpu.memory_space<vmem>>, vector<2x128xf32>,
    %155 = arith.index_cast %c3_i32 : i32 to index
    %c0_70 = arith.constant 0 : index
    %c0_71 = arith.constant 0 : index
    %156 = vector.load %arg5[%155, %c0_70, %c0_71] : memref<8x2x128xf32, #tpu.memory_space<vmem>>, vector<1x2x128xf32>
    %157 = vector.shape_cast %156 : vector<1x2x128xf32> to vector<2x128xf32>
    %158 = vector.shape_cast %152 : vector<2x128xf32> to vector<1x2x128xf32>
    tpu.vector_store %arg5[%155, %c0_70, %c0_71], %158 {strides = array<i32>} : memref<8x2x128xf32, #tpu.memory_space<vmem>>, vector<1x2x128xf32>,
    %c4_i32 = arith.constant 4 : i32
    %c0_72 = arith.constant 0 : index
    %c0_73 = arith.constant 0 : index
    %159 = vector.load %arg6[%c0_72, %c0_73] : memref<2x128xf32, #tpu.memory_space<vmem>>, vector<2x128xf32>
    %c0_74 = arith.constant 0 : index
    %c0_75 = arith.constant 0 : index
    %160 = vector.load %arg7[%c0_74, %c0_75] : memref<2x128xf32, #tpu.memory_space<vmem>>, vector<2x128xf32>
    %161 = arith.index_cast %c4_i32 : i32 to index
    %c0_76 = arith.constant 0 : index
    %c0_77 = arith.constant 0 : index
    %162 = vector.load %arg1[%161, %c0_76, %c0_77] : memref<8x2x512xf32, #tpu.memory_space<vmem>>, vector<1x2x512xf32>
    %163 = vector.shape_cast %162 : vector<1x2x512xf32> to vector<2x512xf32>
    %c0_78 = arith.constant 0 : index
    %c0_79 = arith.constant 0 : index
    %164 = vector.load %arg4[%c0_78, %c0_79] : memref<128x512xf32, #tpu.memory_space<vmem>>, vector<128x512xf32>
    %cst_80 = arith.constant dense<0.000000e+00> : vector<2x512xf32>
    %165 = tpu.matmul %159, %164, %cst_80 {dimension_numbers = #tpu.dot_dimension_numbers<[1], [0], [0], [1], [0, 0, 1, 1], [], []>} : vector<2x128xf32>, vector<128x512xf32>, vector<2x512xf32> -> vector<2x512xf32>
    %166 = arith.addf %163, %165 : vector<2x512xf32>
    %167 = vector.extract_strided_slice %166 {offsets = [0, 0], sizes = [2, 128], strides = [1, 1]} : vector<2x512xf32> to vector<2x128xf32>
    %168 = arith.negf %167 : vector<2x128xf32>
    %169 = math.exp %168 : vector<2x128xf32>
    %cst_81 = arith.constant 1.000000e+00 : f32
    %170 = vector.broadcast %cst_81 : f32 to vector<2x128xf32>
    %171 = arith.addf %170, %169 : vector<2x128xf32>
    %172 = arith.divf %170, %171 : vector<2x128xf32>
    %173 = vector.extract_strided_slice %166 {offsets = [0, 128], sizes = [2, 128], strides = [1, 1]} : vector<2x512xf32> to vector<2x128xf32>
    %174 = arith.negf %173 : vector<2x128xf32>
    %175 = math.exp %174 : vector<2x128xf32>
    %cst_82 = arith.constant 1.000000e+00 : f32
    %176 = vector.broadcast %cst_82 : f32 to vector<2x128xf32>
    %177 = arith.addf %176, %175 : vector<2x128xf32>
    %178 = arith.divf %176, %177 : vector<2x128xf32>
    %179 = vector.extract_strided_slice %166 {offsets = [0, 256], sizes = [2, 128], strides = [1, 1]} : vector<2x512xf32> to vector<2x128xf32>
    %180 = math.tanh %179 : vector<2x128xf32>
    %181 = vector.extract_strided_slice %166 {offsets = [0, 384], sizes = [2, 128], strides = [1, 1]} : vector<2x512xf32> to vector<2x128xf32>
    %182 = arith.negf %181 : vector<2x128xf32>
    %183 = math.exp %182 : vector<2x128xf32>
    %cst_83 = arith.constant 1.000000e+00 : f32
    %184 = vector.broadcast %cst_83 : f32 to vector<2x128xf32>
    %185 = arith.addf %184, %183 : vector<2x128xf32>
    %186 = arith.divf %184, %185 : vector<2x128xf32>
    %187 = arith.mulf %178, %160 : vector<2x128xf32>
    %188 = arith.mulf %172, %180 : vector<2x128xf32>
    %189 = arith.addf %187, %188 : vector<2x128xf32>
    %190 = math.tanh %189 : vector<2x128xf32>
    %191 = arith.mulf %186, %190 : vector<2x128xf32>
    %c0_84 = arith.constant 0 : index
    %c0_85 = arith.constant 0 : index
    %192 = vector.load %arg6[%c0_84, %c0_85] : memref<2x128xf32, #tpu.memory_space<vmem>>, vector<2x128xf32>
    tpu.vector_store %arg6[%c0_84, %c0_85], %191 {strides = array<i32>} : memref<2x128xf32, #tpu.memory_space<vmem>>, vector<2x128xf32>,
    %c0_86 = arith.constant 0 : index
    %c0_87 = arith.constant 0 : index
    %193 = vector.load %arg7[%c0_86, %c0_87] : memref<2x128xf32, #tpu.memory_space<vmem>>, vector<2x128xf32>
    tpu.vector_store %arg7[%c0_86, %c0_87], %189 {strides = array<i32>} : memref<2x128xf32, #tpu.memory_space<vmem>>, vector<2x128xf32>,
    %194 = arith.index_cast %c4_i32 : i32 to index
    %c0_88 = arith.constant 0 : index
    %c0_89 = arith.constant 0 : index
    %195 = vector.load %arg5[%194, %c0_88, %c0_89] : memref<8x2x128xf32, #tpu.memory_space<vmem>>, vector<1x2x128xf32>
    %196 = vector.shape_cast %195 : vector<1x2x128xf32> to vector<2x128xf32>
    %197 = vector.shape_cast %191 : vector<2x128xf32> to vector<1x2x128xf32>
    tpu.vector_store %arg5[%194, %c0_88, %c0_89], %197 {strides = array<i32>} : memref<8x2x128xf32, #tpu.memory_space<vmem>>, vector<1x2x128xf32>,
    %c5_i32 = arith.constant 5 : i32
    %c0_90 = arith.constant 0 : index
    %c0_91 = arith.constant 0 : index
    %198 = vector.load %arg6[%c0_90, %c0_91] : memref<2x128xf32, #tpu.memory_space<vmem>>, vector<2x128xf32>
    %c0_92 = arith.constant 0 : index
    %c0_93 = arith.constant 0 : index
    %199 = vector.load %arg7[%c0_92, %c0_93] : memref<2x128xf32, #tpu.memory_space<vmem>>, vector<2x128xf32>
    %200 = arith.index_cast %c5_i32 : i32 to index
    %c0_94 = arith.constant 0 : index
    %c0_95 = arith.constant 0 : index
    %201 = vector.load %arg1[%200, %c0_94, %c0_95] : memref<8x2x512xf32, #tpu.memory_space<vmem>>, vector<1x2x512xf32>
    %202 = vector.shape_cast %201 : vector<1x2x512xf32> to vector<2x512xf32>
    %c0_96 = arith.constant 0 : index
    %c0_97 = arith.constant 0 : index
    %203 = vector.load %arg4[%c0_96, %c0_97] : memref<128x512xf32, #tpu.memory_space<vmem>>, vector<128x512xf32>
    %cst_98 = arith.constant dense<0.000000e+00> : vector<2x512xf32>
    %204 = tpu.matmul %198, %203, %cst_98 {dimension_numbers = #tpu.dot_dimension_numbers<[1], [0], [0], [1], [0, 0, 1, 1], [], []>} : vector<2x128xf32>, vector<128x512xf32>, vector<2x512xf32> -> vector<2x512xf32>
    %205 = arith.addf %202, %204 : vector<2x512xf32>
    %206 = vector.extract_strided_slice %205 {offsets = [0, 0], sizes = [2, 128], strides = [1, 1]} : vector<2x512xf32> to vector<2x128xf32>
    %207 = arith.negf %206 : vector<2x128xf32>
    %208 = math.exp %207 : vector<2x128xf32>
    %cst_99 = arith.constant 1.000000e+00 : f32
    %209 = vector.broadcast %cst_99 : f32 to vector<2x128xf32>
    %210 = arith.addf %209, %208 : vector<2x128xf32>
    %211 = arith.divf %209, %210 : vector<2x128xf32>
    %212 = vector.extract_strided_slice %205 {offsets = [0, 128], sizes = [2, 128], strides = [1, 1]} : vector<2x512xf32> to vector<2x128xf32>
    %213 = arith.negf %212 : vector<2x128xf32>
    %214 = math.exp %213 : vector<2x128xf32>
    %cst_100 = arith.constant 1.000000e+00 : f32
    %215 = vector.broadcast %cst_100 : f32 to vector<2x128xf32>
    %216 = arith.addf %215, %214 : vector<2x128xf32>
    %217 = arith.divf %215, %216 : vector<2x128xf32>
    %218 = vector.extract_strided_slice %205 {offsets = [0, 256], sizes = [2, 128], strides = [1, 1]} : vector<2x512xf32> to vector<2x128xf32>
    %219 = math.tanh %218 : vector<2x128xf32>
    %220 = vector.extract_strided_slice %205 {offsets = [0, 384], sizes = [2, 128], strides = [1, 1]} : vector<2x512xf32> to vector<2x128xf32>
    %221 = arith.negf %220 : vector<2x128xf32>
    %222 = math.exp %221 : vector<2x128xf32>
    %cst_101 = arith.constant 1.000000e+00 : f32
    %223 = vector.broadcast %cst_101 : f32 to vector<2x128xf32>
    %224 = arith.addf %223, %222 : vector<2x128xf32>
    %225 = arith.divf %223, %224 : vector<2x128xf32>
    %226 = arith.mulf %217, %199 : vector<2x128xf32>
    %227 = arith.mulf %211, %219 : vector<2x128xf32>
    %228 = arith.addf %226, %227 : vector<2x128xf32>
    %229 = math.tanh %228 : vector<2x128xf32>
    %230 = arith.mulf %225, %229 : vector<2x128xf32>
    %c0_102 = arith.constant 0 : index
    %c0_103 = arith.constant 0 : index
    %231 = vector.load %arg6[%c0_102, %c0_103] : memref<2x128xf32, #tpu.memory_space<vmem>>, vector<2x128xf32>
    tpu.vector_store %arg6[%c0_102, %c0_103], %230 {strides = array<i32>} : memref<2x128xf32, #tpu.memory_space<vmem>>, vector<2x128xf32>,
    %c0_104 = arith.constant 0 : index
    %c0_105 = arith.constant 0 : index
    %232 = vector.load %arg7[%c0_104, %c0_105] : memref<2x128xf32, #tpu.memory_space<vmem>>, vector<2x128xf32>
    tpu.vector_store %arg7[%c0_104, %c0_105], %228 {strides = array<i32>} : memref<2x128xf32, #tpu.memory_space<vmem>>, vector<2x128xf32>,
    %233 = arith.index_cast %c5_i32 : i32 to index
    %c0_106 = arith.constant 0 : index
    %c0_107 = arith.constant 0 : index
    %234 = vector.load %arg5[%233, %c0_106, %c0_107] : memref<8x2x128xf32, #tpu.memory_space<vmem>>, vector<1x2x128xf32>
    %235 = vector.shape_cast %234 : vector<1x2x128xf32> to vector<2x128xf32>
    %236 = vector.shape_cast %230 : vector<2x128xf32> to vector<1x2x128xf32>
    tpu.vector_store %arg5[%233, %c0_106, %c0_107], %236 {strides = array<i32>} : memref<8x2x128xf32, #tpu.memory_space<vmem>>, vector<1x2x128xf32>,
    %c6_i32 = arith.constant 6 : i32
    %c0_108 = arith.constant 0 : index
    %c0_109 = arith.constant 0 : index
    %237 = vector.load %arg6[%c0_108, %c0_109] : memref<2x128xf32, #tpu.memory_space<vmem>>, vector<2x128xf32>
    %c0_110 = arith.constant 0 : index
    %c0_111 = arith.constant 0 : index
    %238 = vector.load %arg7[%c0_110, %c0_111] : memref<2x128xf32, #tpu.memory_space<vmem>>, vector<2x128xf32>
    %239 = arith.index_cast %c6_i32 : i32 to index
    %c0_112 = arith.constant 0 : index
    %c0_113 = arith.constant 0 : index
    %240 = vector.load %arg1[%239, %c0_112, %c0_113] : memref<8x2x512xf32, #tpu.memory_space<vmem>>, vector<1x2x512xf32>
    %241 = vector.shape_cast %240 : vector<1x2x512xf32> to vector<2x512xf32>
    %c0_114 = arith.constant 0 : index
    %c0_115 = arith.constant 0 : index
    %242 = vector.load %arg4[%c0_114, %c0_115] : memref<128x512xf32, #tpu.memory_space<vmem>>, vector<128x512xf32>
    %cst_116 = arith.constant dense<0.000000e+00> : vector<2x512xf32>
    %243 = tpu.matmul %237, %242, %cst_116 {dimension_numbers = #tpu.dot_dimension_numbers<[1], [0], [0], [1], [0, 0, 1, 1], [], []>} : vector<2x128xf32>, vector<128x512xf32>, vector<2x512xf32> -> vector<2x512xf32>
    %244 = arith.addf %241, %243 : vector<2x512xf32>
    %245 = vector.extract_strided_slice %244 {offsets = [0, 0], sizes = [2, 128], strides = [1, 1]} : vector<2x512xf32> to vector<2x128xf32>
    %246 = arith.negf %245 : vector<2x128xf32>
    %247 = math.exp %246 : vector<2x128xf32>
    %cst_117 = arith.constant 1.000000e+00 : f32
    %248 = vector.broadcast %cst_117 : f32 to vector<2x128xf32>
    %249 = arith.addf %248, %247 : vector<2x128xf32>
    %250 = arith.divf %248, %249 : vector<2x128xf32>
    %251 = vector.extract_strided_slice %244 {offsets = [0, 128], sizes = [2, 128], strides = [1, 1]} : vector<2x512xf32> to vector<2x128xf32>
    %252 = arith.negf %251 : vector<2x128xf32>
    %253 = math.exp %252 : vector<2x128xf32>
    %cst_118 = arith.constant 1.000000e+00 : f32
    %254 = vector.broadcast %cst_118 : f32 to vector<2x128xf32>
    %255 = arith.addf %254, %253 : vector<2x128xf32>
    %256 = arith.divf %254, %255 : vector<2x128xf32>
    %257 = vector.extract_strided_slice %244 {offsets = [0, 256], sizes = [2, 128], strides = [1, 1]} : vector<2x512xf32> to vector<2x128xf32>
    %258 = math.tanh %257 : vector<2x128xf32>
    %259 = vector.extract_strided_slice %244 {offsets = [0, 384], sizes = [2, 128], strides = [1, 1]} : vector<2x512xf32> to vector<2x128xf32>
    %260 = arith.negf %259 : vector<2x128xf32>
    %261 = math.exp %260 : vector<2x128xf32>
    %cst_119 = arith.constant 1.000000e+00 : f32
    %262 = vector.broadcast %cst_119 : f32 to vector<2x128xf32>
    %263 = arith.addf %262, %261 : vector<2x128xf32>
    %264 = arith.divf %262, %263 : vector<2x128xf32>
    %265 = arith.mulf %256, %238 : vector<2x128xf32>
    %266 = arith.mulf %250, %258 : vector<2x128xf32>
    %267 = arith.addf %265, %266 : vector<2x128xf32>
    %268 = math.tanh %267 : vector<2x128xf32>
    %269 = arith.mulf %264, %268 : vector<2x128xf32>
    %c0_120 = arith.constant 0 : index
    %c0_121 = arith.constant 0 : index
    %270 = vector.load %arg6[%c0_120, %c0_121] : memref<2x128xf32, #tpu.memory_space<vmem>>, vector<2x128xf32>
    tpu.vector_store %arg6[%c0_120, %c0_121], %269 {strides = array<i32>} : memref<2x128xf32, #tpu.memory_space<vmem>>, vector<2x128xf32>,
    %c0_122 = arith.constant 0 : index
    %c0_123 = arith.constant 0 : index
    %271 = vector.load %arg7[%c0_122, %c0_123] : memref<2x128xf32, #tpu.memory_space<vmem>>, vector<2x128xf32>
    tpu.vector_store %arg7[%c0_122, %c0_123], %267 {strides = array<i32>} : memref<2x128xf32, #tpu.memory_space<vmem>>, vector<2x128xf32>,
    %272 = arith.index_cast %c6_i32 : i32 to index
    %c0_124 = arith.constant 0 : index
    %c0_125 = arith.constant 0 : index
    %273 = vector.load %arg5[%272, %c0_124, %c0_125] : memref<8x2x128xf32, #tpu.memory_space<vmem>>, vector<1x2x128xf32>
    %274 = vector.shape_cast %273 : vector<1x2x128xf32> to vector<2x128xf32>
    %275 = vector.shape_cast %269 : vector<2x128xf32> to vector<1x2x128xf32>
    tpu.vector_store %arg5[%272, %c0_124, %c0_125], %275 {strides = array<i32>} : memref<8x2x128xf32, #tpu.memory_space<vmem>>, vector<1x2x128xf32>,
    %c7_i32 = arith.constant 7 : i32
    %c0_126 = arith.constant 0 : index
    %c0_127 = arith.constant 0 : index
    %276 = vector.load %arg6[%c0_126, %c0_127] : memref<2x128xf32, #tpu.memory_space<vmem>>, vector<2x128xf32>
    %c0_128 = arith.constant 0 : index
    %c0_129 = arith.constant 0 : index
    %277 = vector.load %arg7[%c0_128, %c0_129] : memref<2x128xf32, #tpu.memory_space<vmem>>, vector<2x128xf32>
    %278 = arith.index_cast %c7_i32 : i32 to index
    %c0_130 = arith.constant 0 : index
    %c0_131 = arith.constant 0 : index
    %279 = vector.load %arg1[%278, %c0_130, %c0_131] : memref<8x2x512xf32, #tpu.memory_space<vmem>>, vector<1x2x512xf32>
    %280 = vector.shape_cast %279 : vector<1x2x512xf32> to vector<2x512xf32>
    %c0_132 = arith.constant 0 : index
    %c0_133 = arith.constant 0 : index
    %281 = vector.load %arg4[%c0_132, %c0_133] : memref<128x512xf32, #tpu.memory_space<vmem>>, vector<128x512xf32>
    %cst_134 = arith.constant dense<0.000000e+00> : vector<2x512xf32>
    %282 = tpu.matmul %276, %281, %cst_134 {dimension_numbers = #tpu.dot_dimension_numbers<[1], [0], [0], [1], [0, 0, 1, 1], [], []>} : vector<2x128xf32>, vector<128x512xf32>, vector<2x512xf32> -> vector<2x512xf32>
    %283 = arith.addf %280, %282 : vector<2x512xf32>
    %284 = vector.extract_strided_slice %283 {offsets = [0, 0], sizes = [2, 128], strides = [1, 1]} : vector<2x512xf32> to vector<2x128xf32>
    %285 = arith.negf %284 : vector<2x128xf32>
    %286 = math.exp %285 : vector<2x128xf32>
    %cst_135 = arith.constant 1.000000e+00 : f32
    %287 = vector.broadcast %cst_135 : f32 to vector<2x128xf32>
    %288 = arith.addf %287, %286 : vector<2x128xf32>
    %289 = arith.divf %287, %288 : vector<2x128xf32>
    %290 = vector.extract_strided_slice %283 {offsets = [0, 128], sizes = [2, 128], strides = [1, 1]} : vector<2x512xf32> to vector<2x128xf32>
    %291 = arith.negf %290 : vector<2x128xf32>
    %292 = math.exp %291 : vector<2x128xf32>
    %cst_136 = arith.constant 1.000000e+00 : f32
    %293 = vector.broadcast %cst_136 : f32 to vector<2x128xf32>
    %294 = arith.addf %293, %292 : vector<2x128xf32>
    %295 = arith.divf %293, %294 : vector<2x128xf32>
    %296 = vector.extract_strided_slice %283 {offsets = [0, 256], sizes = [2, 128], strides = [1, 1]} : vector<2x512xf32> to vector<2x128xf32>
    %297 = math.tanh %296 : vector<2x128xf32>
    %298 = vector.extract_strided_slice %283 {offsets = [0, 384], sizes = [2, 128], strides = [1, 1]} : vector<2x512xf32> to vector<2x128xf32>
    %299 = arith.negf %298 : vector<2x128xf32>
    %300 = math.exp %299 : vector<2x128xf32>
    %cst_137 = arith.constant 1.000000e+00 : f32
    %301 = vector.broadcast %cst_137 : f32 to vector<2x128xf32>
    %302 = arith.addf %301, %300 : vector<2x128xf32>
    %303 = arith.divf %301, %302 : vector<2x128xf32>
    %304 = arith.mulf %295, %277 : vector<2x128xf32>
    %305 = arith.mulf %289, %297 : vector<2x128xf32>
    %306 = arith.addf %304, %305 : vector<2x128xf32>
    %307 = math.tanh %306 : vector<2x128xf32>
    %308 = arith.mulf %303, %307 : vector<2x128xf32>
    %c0_138 = arith.constant 0 : index
    %c0_139 = arith.constant 0 : index
    %309 = vector.load %arg6[%c0_138, %c0_139] : memref<2x128xf32, #tpu.memory_space<vmem>>, vector<2x128xf32>
    tpu.vector_store %arg6[%c0_138, %c0_139], %308 {strides = array<i32>} : memref<2x128xf32, #tpu.memory_space<vmem>>, vector<2x128xf32>,
    %c0_140 = arith.constant 0 : index
    %c0_141 = arith.constant 0 : index
    %310 = vector.load %arg7[%c0_140, %c0_141] : memref<2x128xf32, #tpu.memory_space<vmem>>, vector<2x128xf32>
    tpu.vector_store %arg7[%c0_140, %c0_141], %306 {strides = array<i32>} : memref<2x128xf32, #tpu.memory_space<vmem>>, vector<2x128xf32>,
    %311 = arith.index_cast %c7_i32 : i32 to index
    %c0_142 = arith.constant 0 : index
    %c0_143 = arith.constant 0 : index
    %312 = vector.load %arg5[%311, %c0_142, %c0_143] : memref<8x2x128xf32, #tpu.memory_space<vmem>>, vector<1x2x128xf32>
    %313 = vector.shape_cast %312 : vector<1x2x128xf32> to vector<2x128xf32>
    %314 = vector.shape_cast %308 : vector<2x128xf32> to vector<1x2x128xf32>
    tpu.vector_store %arg5[%311, %c0_142, %c0_143], %314 {strides = array<i32>} : memref<8x2x128xf32, #tpu.memory_space<vmem>>, vector<1x2x128xf32>,
    %c8_i32 = arith.constant 8 : i32
    return
  }
  func.func @transform_0(%arg0: i32) -> (i32, i32, i32) {
    %c0_i32 = arith.constant 0 : i32
    %c0_i32_0 = arith.constant 0 : i32
    %c0_i32_1 = arith.constant 0 : i32
    return %arg0, %c0_i32, %c0_i32_0 : i32, i32, i32
  }
  func.func @transform_1(%arg0: i32) -> (i32, i32) {
    %c0_i32 = arith.constant 0 : i32
    %c0_i32_0 = arith.constant 0 : i32
    %c0_i32_1 = arith.constant 0 : i32
    return %c0_i32, %c0_i32_0 : i32, i32
  }
  func.func @transform_2(%arg0: i32) -> (i32, i32) {
    %c0_i32 = arith.constant 0 : i32
    %c0_i32_0 = arith.constant 0 : i32
    %c0_i32_1 = arith.constant 0 : i32
    return %c0_i32, %c0_i32_0 : i32, i32
  }
  func.func @transform_3(%arg0: i32) -> (i32, i32) {
    %c0_i32 = arith.constant 0 : i32
    %c0_i32_0 = arith.constant 0 : i32
    %c0_i32_1 = arith.constant 0 : i32
    return %c0_i32, %c0_i32_0 : i32, i32
  }
  func.func @transform_4(%arg0: i32) -> (i32, i32, i32) {
    %c0_i32 = arith.constant 0 : i32
    %c0_i32_0 = arith.constant 0 : i32
    %c0_i32_1 = arith.constant 0 : i32
    return %arg0, %c0_i32, %c0_i32_0 : i32, i32, i32
  }
}

</mosaic_0001>

<llo_original>
// kernel: lstm_decode.1
$region0: #{lstm_decode.1}
  #allocation0 [shape = 'u32[]', space=smem, size = 0x4, offset = 0x4, fixed_abs, tag = 'smem constant byte address 0x4 - core index']
  #allocation1 [shape = 'u32[144,128]{1,0:T(1,128)}', space=vmem, size = 0x12000, scoped, tag = 'internal scratch']
  #allocation2 [shape = 'f32[2,128]{1,0:T(2,128)}', space=vmem, size = 0x400, scoped, tag = 'scratch operand']
  #allocation3 [shape = 'f32[2,128]{1,0:T(2,128)}', space=vmem, size = 0x400, scoped, tag = 'scratch operand']
  %s0 = inlined_call_operand.vmem [shape: f32[8,2,512], index: 0, kind: input, shape index: {}]
  %s1 = inlined_call_operand.vmem [shape: f32[2,128], index: 1, kind: input, shape index: {}]
  %s2 = inlined_call_operand.vmem [shape: f32[2,128], index: 2, kind: input, shape index: {}]
  %s3 = inlined_call_operand.vmem [shape: f32[128,512], index: 3, kind: input, shape index: {}]
  %s4 = inlined_call_operand.vmem [shape: f32[8,2,128], index: 4, kind: output, shape index: {}]
  %s5 = sld [smem:[#allocation0]]
  $region30: #{lstm_decode.1} parent=0
    _
  %s7 = ssub.s32 1, %s5
  %s8 = scalar_select 0, %s7, %s5
  // Predicated region
  $region2: #{lstm_decode.1} parent=0 // pred_check
    _
  $region3: #{lstm_decode.1} parent=0 // pred_check_branch
    %10 = sbr.rel (0) target = $region5
  $region4: #{lstm_decode.1} parent=0 // pred_region
    _
  $region5: #{lstm_decode.1} parent=0 // pred_fallthru
    _
  // Predicated region
  $region6: #{lstm_decode.1} parent=0 // pred_check
    _
  $region7: #{lstm_decode.1} parent=0 // pred_check_branch
    %12 = sbr.rel (0) target = $region9
  $region8: #{lstm_decode.1} parent=0 // pred_region
    _
  $region9: #{lstm_decode.1} parent=0 // pred_fallthru
    _
  // Predicated region
  $region10: #{lstm_decode.1} parent=0 // pred_check
    _
  $region11: #{lstm_decode.1} parent=0 // pred_check_branch
    %14 = sbr.rel (0) target = $region13
  $region12: #{lstm_decode.1} parent=0 // pred_region
    _
  $region13: #{lstm_decode.1} parent=0 // pred_fallthru
    _
  // Predicated region
  $region14: #{lstm_decode.1} parent=0 // pred_check
    _
  $region15: #{lstm_decode.1} parent=0 // pred_check_branch
    %16 = sbr.rel (0) target = $region17
  $region16: #{lstm_decode.1} parent=0 // pred_region
    _
  $region17: #{lstm_decode.1} parent=0 // pred_fallthru
    _
  %p17 = scmp.eq.s32.totalorder 0, 0
  // Predicated region
  $region18: #{lstm_decode.1} parent=0 // pred_check
    %p18 = pneg %p17
  $region19: #{lstm_decode.1} parent=0 // pred_check_branch
    %20 = sbr.rel (%p18) target = $region21
  $region20: #{lstm_decode.1} parent=0 // pred_region
    %v21 = vld [vmem:[%s1] sm:$0x3]
    %22 = vst [vmem:[#allocation2] sm:$0x3] %v21
    %v23 = vld [vmem:[%s2] sm:$0x3]
    %24 = vst [vmem:[#allocation3] sm:$0x3] %v23
  $region21: #{lstm_decode.1} parent=0 // pred_fallthru
    _
  %v25 = vld [vmem:[#allocation2] sm:$0x3]
  %v26 = vld [vmem:[#allocation3] sm:$0x3]
  %v27 = vld [vmem:[%s0] sm:$0xff]
  %v28 = vld [vmem:[%s3] sm:$0xff]
  %v29 = vld [vmem:[%s3 + $0x8] sm:$0xff]
  %v30 = vld [vmem:[%s3 + $0x10] sm:$0xff]
  %v31 = vld [vmem:[%s3 + $0x18] sm:$0xff]
  %v32 = vld [vmem:[%s3 + $0x20] sm:$0xff]
  %v33 = vld [vmem:[%s3 + $0x28] sm:$0xff]
  %v34 = vld [vmem:[%s3 + $0x30] sm:$0xff]
  %v35 = vld [vmem:[%s3 + $0x38] sm:$0xff]
  %v36 = vld [vmem:[%s3 + $0x40] sm:$0xff]
  %v37 = vld [vmem:[%s3 + $0x48] sm:$0xff]
  %v38 = vld [vmem:[%s3 + $0x50] sm:$0xff]
  %v39 = vld [vmem:[%s3 + $0x58] sm:$0xff]
  %v40 = vld [vmem:[%s3 + $0x60] sm:$0xff]
  %v41 = vld [vmem:[%s3 + $0x68] sm:$0xff]
  %v42 = vld [vmem:[%s3 + $0x70] sm:$0xff]
  %v43 = vld [vmem:[%s3 + $0x78] sm:$0xff]
  %v44 = vld [vmem:[%s3 + $0x80] sm:$0xff]
  %v45 = vld [vmem:[%s3 + $0x88] sm:$0xff]
  %v46 = vld [vmem:[%s3 + $0x90] sm:$0xff]
  %v47 = vld [vmem:[%s3 + $0x98] sm:$0xff]
  %v48 = vld [vmem:[%s3 + $0xa0] sm:$0xff]
  %v49 = vld [vmem:[%s3 + $0xa8] sm:$0xff]
  %v50 = vld [vmem:[%s3 + $0xb0] sm:$0xff]
  %v51 = vld [vmem:[%s3 + $0xb8] sm:$0xff]
  %v52 = vld [vmem:[%s3 + $0xc0] sm:$0xff]
  %v53 = vld [vmem:[%s3 + $0xc8] sm:$0xff]
  %v54 = vld [vmem:[%s3 + $0xd0] sm:$0xff]
  %v55 = vld [vmem:[%s3 + $0xd8] sm:$0xff]
  %v56 = vld [vmem:[%s3 + $0xe0] sm:$0xff]
  %v57 = vld [vmem:[%s3 + $0xe8] sm:$0xff]
  %v58 = vld [vmem:[%s3 + $0xf0] sm:$0xff]
  %v59 = vld [vmem:[%s3 + $0xf8] sm:$0xff]
  %v60 = vld [vmem:[%s3 + $0x100] sm:$0xff]
  %v61 = vld [vmem:[%s3 + $0x108] sm:$0xff]
  %v62 = vld [vmem:[%s3 + $0x110] sm:$0xff]
  %v63 = vld [vmem:[%s3 + $0x118] sm:$0xff]
  %v64 = vld [vmem:[%s3 + $0x120] sm:$0xff]
  %v65 = vld [vmem:[%s3 + $0x128] sm:$0xff]
  %v66 = vld [vmem:[%s3 + $0x130] sm:$0xff]
  %v67 = vld [vmem:[%s3 + $0x138] sm:$0xff]
  %v68 = vld [vmem:[%s3 + $0x140] sm:$0xff]
  %v69 = vld [vmem:[%s3 + $0x148] sm:$0xff]
  %v70 = vld [vmem:[%s3 + $0x150] sm:$0xff]
  %v71 = vld [vmem:[%s3 + $0x158] sm:$0xff]
  %v72 = vld [vmem:[%s3 + $0x160] sm:$0xff]
  %v73 = vld [vmem:[%s3 + $0x168] sm:$0xff]
  %v74 = vld [vmem:[%s3 + $0x170] sm:$0xff]
  %v75 = vld [vmem:[%s3 + $0x178] sm:$0xff]
  %v76 = vld [vmem:[%s3 + $0x180] sm:$0xff]
  %v77 = vld [vmem:[%s3 + $0x188] sm:$0xff]
  %v78 = vld [vmem:[%s3 + $0x190] sm:$0xff]
  %v79 = vld [vmem:[%s3 + $0x198] sm:$0xff]
  %v80 = vld [vmem:[%s3 + $0x1a0] sm:$0xff]
  %v81 = vld [vmem:[%s3 + $0x1a8] sm:$0xff]
  %v82 = vld [vmem:[%s3 + $0x1b0] sm:$0xff]
  %v83 = vld [vmem:[%s3 + $0x1b8] sm:$0xff]
  %v84 = vld [vmem:[%s3 + $0x1c0] sm:$0xff]
  %v85 = vld [vmem:[%s3 + $0x1c8] sm:$0xff]
  %v86 = vld [vmem:[%s3 + $0x1d0] sm:$0xff]
  %v87 = vld [vmem:[%s3 + $0x1d8] sm:$0xff]
  %v88 = vld [vmem:[%s3 + $0x1e0] sm:$0xff]
  %v89 = vld [vmem:[%s3 + $0x1e8] sm:$0xff]
  %v90 = vld [vmem:[%s3 + $0x1f0] sm:$0xff]
  %v91 = vld [vmem:[%s3 + $0x1f8] sm:$0xff]
  %92 = vmatprep.subr.mxu0 %v29
  %93 = vmatpush1.msra.mxu0 %v28
  %94 = vmatprep.subr.mxu0 %v33
  %95 = vmatpush1.msra.mxu0 %v32
  %96 = vmatprep.subr.mxu0 %v37
  %97 = vmatpush1.msra.mxu0 %v36
  %98 = vmatprep.subr.mxu0 %v41
  %99 = vmatpush1.msra.mxu0 %v40
  %100 = vmatprep.subr.mxu0 %v45
  %101 = vmatpush1.msra.mxu0 %v44
  %102 = vmatprep.subr.mxu0 %v49
  %103 = vmatpush1.msra.mxu0 %v48
  %104 = vmatprep.subr.mxu0 %v53
  %105 = vmatpush1.msra.mxu0 %v52
  %106 = vmatprep.subr.mxu0 %v57
  %107 = vmatpush1.msra.mxu0 %v56
  %108 = vmatprep.subr.mxu0 %v61
  %109 = vmatpush1.msra.mxu0 %v60
  %110 = vmatprep.subr.mxu0 %v65
  %111 = vmatpush1.msra.mxu0 %v64
  %112 = vmatprep.subr.mxu0 %v69
  %113 = vmatpush1.msra.mxu0 %v68
  %114 = vmatprep.subr.mxu0 %v73
  %115 = vmatpush1.msra.mxu0 %v72
  %116 = vmatprep.subr.mxu0 %v77
  %117 = vmatpush1.msra.mxu0 %v76
  %118 = vmatprep.subr.mxu0 %v81
  %119 = vmatpush1.msra.mxu0 %v80
  %120 = vmatprep.subr.mxu0 %v85
  %121 = vmatpush1.msra.mxu0 %v84
  %122 = vmatprep.subr.mxu0 %v89
  %123 = vmatpush1.msra.mxu0 %v88
  %124 = vmatprep.subr.mxu0 0.0
  %125 = vmatpush1.msra.mxu0 0.0
  %126 = vmatprep.subr.mxu0 0.0
  %127 = vmatpush1.msra.mxu0 0.0
  %128 = vmatprep.subr.mxu0 0.0
  %129 = vmatpush1.msra.mxu0 0.0
  %130 = vmatprep.subr.mxu0 0.0
  %131 = vmatpush1.msra.mxu0 0.0
  %132 = vmatprep.subr.mxu0 0.0
  %133 = vmatpush1.msra.mxu0 0.0
  %134 = vmatprep.subr.mxu0 0.0
  %135 = vmatpush1.msra.mxu0 0.0
  %136 = vmatprep.subr.mxu0 0.0
  %137 = vmatpush1.msra.mxu0 0.0
  %138 = vmatprep.subr.mxu0 0.0
  %139 = vmatpush1.msra.mxu0 0.0
  %140 = vmatprep.subr.mxu0 0.0
  %141 = vmatpush1.msra.mxu0 0.0
  %142 = vmatprep.subr.mxu0 0.0
  %143 = vmatpush1.msra.mxu0 0.0
  %144 = vmatprep.subr.mxu0 0.0
  %145 = vmatpush1.msra.mxu0 0.0
  %146 = vmatprep.subr.mxu0 0.0
  %147 = vmatpush1.msra.mxu0 0.0
  %148 = vmatprep.subr.mxu0 0.0
  %149 = vmatpush1.msra.mxu0 0.0
  %150 = vmatprep.subr.mxu0 0.0
  %151 = vmatpush1.msra.mxu0 0.0
  %152 = vmatprep.subr.mxu0 0.0
  %153 = vmatpush1.msra.mxu0 0.0
  %154 = vmatprep.subr.mxu0 0.0
  %155 = vmatpush1.msra.mxu0 0.0
  %156 = vmatprep.mubr.f32.mxu0 0.0
  %157 = vmatmul.mubr.f32.gmra.mrb[0].mxu0 %v25
  %v158 = vpop.f32.mrb[0].mxu0
  %v159 = vadd.f32 0.0, %v158
  %v160 = vpop.f32.mrb[0].mxu0
  %v161 = vadd.f32 0.0, %v160
  %162 = vdwg.mxu0
  %163 = vmatprep.subr.mxu0 %v31
  %164 = vmatpush1.msra.mxu0 %v30
  %165 = vmatprep.subr.mxu0 %v35
  %166 = vmatpush1.msra.mxu0 %v34
  %167 = vmatprep.subr.mxu0 %v39
  %168 = vmatpush1.msra.mxu0 %v38
  %169 = vmatprep.subr.mxu0 %v43
  %170 = vmatpush1.msra.mxu0 %v42
  %171 = vmatprep.subr.mxu0 %v47
  %172 = vmatpush1.msra.mxu0 %v46
  %173 = vmatprep.subr.mxu0 %v51
  %174 = vmatpush1.msra.mxu0 %v50
  %175 = vmatprep.subr.mxu0 %v55
  %176 = vmatpush1.msra.mxu0 %v54
  %177 = vmatprep.subr.mxu0 %v59
  %178 = vmatpush1.msra.mxu0 %v58
  %179 = vmatprep.subr.mxu0 %v63
  %180 = vmatpush1.msra.mxu0 %v62
  %181 = vmatprep.subr.mxu0 %v67
  %182 = vmatpush1.msra.mxu0 %v66
  %183 = vmatprep.subr.mxu0 %v71
  %184 = vmatpush1.msra.mxu0 %v70
  %185 = vmatprep.subr.mxu0 %v75
  %186 = vmatpush1.msra.mxu0 %v74
  %187 = vmatprep.subr.mxu0 %v79
  %188 = vmatpush1.msra.mxu0 %v78
  %189 = vmatprep.subr.mxu0 %v83
  %190 = vmatpush1.msra.mxu0 %v82
  %191 = vmatprep.subr.mxu0 %v87
  %192 = vmatpush1.msra.mxu0 %v86
  %193 = vmatprep.subr.mxu0 %v91
  %194 = vmatpush1.msra.mxu0 %v90
  %195 = vmatprep.subr.mxu0 0.0
  %196 = vmatpush1.msra.mxu0 0.0
  %197 = vmatprep.subr.mxu0 0.0
  %198 = vmatpush1.msra.mxu0 0.0
  %199 = vmatprep.subr.mxu0 0.0
  %200 = vmatpush1.msra.mxu0 0.0
  %201 = vmatprep.subr.mxu0 0.0
  %202 = vmatpush1.msra.mxu0 0.0
  %203 = vmatprep.subr.mxu0 0.0
  %204 = vmatpush1.msra.mxu0 0.0
  %205 = vmatprep.subr.mxu0 0.0
  %206 = vmatpush1.msra.mxu0 0.0
  %207 = vmatprep.subr.mxu0 0.0
  %208 = vmatpush1.msra.mxu0 0.0
  %209 = vmatprep.subr.mxu0 0.0
  %210 = vmatpush1.msra.mxu0 0.0
  %211 = vmatprep.subr.mxu0 0.0
  %212 = vmatpush1.msra.mxu0 0.0
  %213 = vmatprep.subr.mxu0 0.0
  %214 = vmatpush1.msra.mxu0 0.0
  %215 = vmatprep.subr.mxu0 0.0
  %216 = vmatpush1.msra.mxu0 0.0
  %217 = vmatprep.subr.mxu0 0.0
  %218 = vmatpush1.msra.mxu0 0.0
  %219 = vmatprep.subr.mxu0 0.0
  %220 = vmatpush1.msra.mxu0 0.0
  %221 = vmatprep.subr.mxu0 0.0
  %222 = vmatpush1.msra.mxu0 0.0
  %223 = vmatprep.subr.mxu0 0.0
  %224 = vmatpush1.msra.mxu0 0.0
  %225 = vmatprep.subr.mxu0 0.0
  %226 = vmatpush1.msra.mxu0 0.0
  %227 = vmatprep.mubr.f32.mxu0 0.0
  %228 = vmatmul.mubr.f32.gmra.mrb[0].mxu0 %v25
  %v229 = vpop.f32.mrb[0].mxu0
  %v230 = vadd.f32 0.0, %v229
  %v231 = vpop.f32.mrb[0].mxu0
  %v232 = vadd.f32 0.0, %v231
  %233 = vdwg.mxu0
  %v238 = vcombine.low %v159, %v161
  %v239 = vcombine.low %v230, %v232
  %v241 = vunpack.c.l.s4 1983009808
  %v242 = vunpack.c.0.s8 %v241
  %v243 = vlaneseq
  %v244 = vshrl.u32 %v243, 7
  %v245 = vsub.s32 %v242, %v244
  %v246 = vrot.slane %v238, %v245
  %v248 = vunpack.c.l.s4 1983009808
  %v249 = vunpack.c.0.s8 %v248
  %v250 = vlaneseq
  %v251 = vshrl.u32 %v250, 7
  %v252 = vsub.s32 %v249, %v251
  %v253 = vrot.slane %v239, %v252
  %v254 = vcombine.low %v246, %v253
  %v256 = vadd.f32 %v27, %v254
  %v257 = vxor.u32 %v256, 2147483648
  %v258 = vmul.f32 %v257, 1.442695
  %v259 = vpow.pop %v258
  %v260 = vadd.f32 %v259, 1.0
  %v261 = vrcp.pop %v260
  %v262 = vmul.f32 1.0, %v261
  %v264 = vrot.slane %v256, 2
  %v266 = vxor.u32 %v264, 2147483648
  %v267 = vmul.f32 %v266, 1.442695
  %v268 = vpow.pop %v267
  %v269 = vadd.f32 %v268, 1.0
  %v270 = vrcp.pop %v269
  %v271 = vmul.f32 1.0, %v270
  %v272 = vrot.slane %v256, 4
  %v274 = vtanh.pop %v272
  %v275 = vrot.slane %v256, 6
  %v277 = vxor.u32 %v275, 2147483648
  %v278 = vmul.f32 %v277, 1.442695
  %v279 = vpow.pop %v278
  %v280 = vadd.f32 %v279, 1.0
  %v281 = vrcp.pop %v280
  %v282 = vmul.f32 1.0, %v281
  %v283 = vmul.f32 %v271, %v26
  %v284 = vmul.f32 %v262, %v274
  %v285 = vadd.f32 %v283, %v284
  %v286 = vtanh.pop %v285
  %v287 = vmul.f32 %v282, %v286
  %288 = vst [vmem:[#allocation2] sm:$0x3] %v287
  %289 = vst [vmem:[#allocation3] sm:$0x3] %v285
  %290 = vst [vmem:[%s4] sm:$0x3] %v287
  %v291 = vld [vmem:[#allocation2] sm:$0x3]
  %v292 = vld [vmem:[#allocation3] sm:$0x3]
  %s293 = scalar_lea.vmem %s0, 8
  %v294 = vld [vmem:[%s293] sm:$0xff]
  %v295 = vld [vmem:[%s3] sm:$0xff]
  %v296 = vld [vmem:[%s3 + $0x8] sm:$0xff]
  %v297 = vld [vmem:[%s3 + $0x10] sm:$0xff]
  %v298 = vld [vmem:[%s3 + $0x18] sm:$0xff]
  %v299 = vld [vmem:[%s3 + $0x20] sm:$0xff]
  %v300 = vld [vmem:[%s3 + $0x28] sm:$0xff]
  %v301 = vld [vmem:[%s3 + $0x30] sm:$0xff]
  %v302 = vld [vmem:[%s3 + $0x38] sm:$0xff]
  %v303 = vld [vmem:[%s3 + $0x40] sm:$0xff]
  %v304 = vld [vmem:[%s3 + $0x48] sm:$0xff]
  %v305 = vld [vmem:[%s3 + $0x50] sm:$0xff]
  %v306 = vld [vmem:[%s3 + $0x58] sm:$0xff]
  %v307 = vld [vmem:[%s3 + $0x60] sm:$0xff]
  %v308 = vld [vmem:[%s3 + $0x68] sm:$0xff]
  %v309 = vld [vmem:[%s3 + $0x70] sm:$0xff]
  %v310 = vld [vmem:[%s3 + $0x78] sm:$0xff]
  %v311 = vld [vmem:[%s3 + $0x80] sm:$0xff]
  %v312 = vld [vmem:[%s3 + $0x88] sm:$0xff]
  %v313 = vld [vmem:[%s3 + $0x90] sm:$0xff]
  %v314 = vld [vmem:[%s3 + $0x98] sm:$0xff]
  %v315 = vld [vmem:[%s3 + $0xa0] sm:$0xff]
  %v316 = vld [vmem:[%s3 + $0xa8] sm:$0xff]
  %v317 = vld [vmem:[%s3 + $0xb0] sm:$0xff]
  %v318 = vld [vmem:[%s3 + $0xb8] sm:$0xff]
  %v319 = vld [vmem:[%s3 + $0xc0] sm:$0xff]
  %v320 = vld [vmem:[%s3 + $0xc8] sm:$0xff]
  %v321 = vld [vmem:[%s3 + $0xd0] sm:$0xff]
  %v322 = vld [vmem:[%s3 + $0xd8] sm:$0xff]
  %v323 = vld [vmem:[%s3 + $0xe0] sm:$0xff]
  %v324 = vld [vmem:[%s3 + $0xe8] sm:$0xff]
  %v325 = vld [vmem:[%s3 + $0xf0] sm:$0xff]
  %v326 = vld [vmem:[%s3 + $0xf8] sm:$0xff]
  %v327 = vld [vmem:[%s3 + $0x100] sm:$0xff]
  %v328 = vld [vmem:[%s3 + $0x108] sm:$0xff]
  %v329 = vld [vmem:[%s3 + $0x110] sm:$0xff]
  %v330 = vld [vmem:[%s3 + $0x118] sm:$0xff]
  %v331 = vld [vmem:[%s3 + $0x120] sm:$0xff]
  %v332 = vld [vmem:[%s3 + $0x128] sm:$0xff]
  %v333 = vld [vmem:[%s3 + $0x130] sm:$0xff]
  %v334 = vld [vmem:[%s3 + $0x138] sm:$0xff]
  %v335 = vld [vmem:[%s3 + $0x140] sm:$0xff]
  %v336 = vld [vmem:[%s3 + $0x148] sm:$0xff]
  %v337 = vld [vmem:[%s3 + $0x150] sm:$0xff]
  %v338 = vld [vmem:[%s3 + $0x158] sm:$0xff]
  %v339 = vld [vmem:[%s3 + $0x160] sm:$0xff]
  %v340 = vld [vmem:[%s3 + $0x168] sm:$0xff]
  %v341 = vld [vmem:[%s3 + $0x170] sm:$0xff]
  %v342 = vld [vmem:[%s3 + $0x178] sm:$0xff]
  %v343 = vld [vmem:[%s3 + $0x180] sm:$0xff]
  %v344 = vld [vmem:[%s3 + $0x188] sm:$0xff]
  %v345 = vld [vmem:[%s3 + $0x190] sm:$0xff]
  %v346 = vld [vmem:[%s3 + $0x198] sm:$0xff]
  %v347 = vld [vmem:[%s3 + $0x1a0] sm:$0xff]
  %v348 = vld [vmem:[%s3 + $0x1a8] sm:$0xff]
  %v349 = vld [vmem:[%s3 + $0x1b0] sm:$0xff]
  %v350 = vld [vmem:[%s3 + $0x1b8] sm:$0xff]
  %v351 = vld [vmem:[%s3 + $0x1c0] sm:$0xff]
  %v352 = vld [vmem:[%s3 + $0x1c8] sm:$0xff]
  %v353 = vld [vmem:[%s3 + $0x1d0] sm:$0xff]
  %v354 = vld [vmem:[%s3 + $0x1d8] sm:$0xff]
  %v355 = vld [vmem:[%s3 + $0x1e0] sm:$0xff]
  %v356 = vld [vmem:[%s3 + $0x1e8] sm:$0xff]
  %v357 = vld [vmem:[%s3 + $0x1f0] sm:$0xff]
  %v358 = vld [vmem:[%s3 + $0x1f8] sm:$0xff]
  %359 = vmatprep.subr.mxu0 %v296
  %360 = vmatpush1.msra.mxu0 %v295
  %361 = vmatprep.subr.mxu0 %v300
  %362 = vmatpush1.msra.mxu0 %v299
  %363 = vmatprep.subr.mxu0 %v304
  %364 = vmatpush1.msra.mxu0 %v303
  %365 = vmatprep.subr.mxu0 %v308
  %366 = vmatpush1.msra.mxu0 %v307
  %367 = vmatprep.subr.mxu0 %v312
  %368 = vmatpush1.msra.mxu0 %v311
  %369 = vmatprep.subr.mxu0 %v316
  %370 = vmatpush1.msra.mxu0 %v315
  %371 = vmatprep.subr.mxu0 %v320
  %372 = vmatpush1.msra.mxu0 %v319
  %373 = vmatprep.subr.mxu0 %v324
  %374 = vmatpush1.msra.mxu0 %v323
  %375 = vmatprep.subr.mxu0 %v328
  %376 = vmatpush1.msra.mxu0 %v327
  %377 = vmatprep.subr.mxu0 %v332
  %378 = vmatpush1.msra.mxu0 %v331
  %379 = vmatprep.subr.mxu0 %v336
  %380 = vmatpush1.msra.mxu0 %v335
  %381 = vmatprep.subr.mxu0 %v340
  %382 = vmatpush1.msra.mxu0 %v339
  %383 = vmatprep.subr.mxu0 %v344
  %384 = vmatpush1.msra.mxu0 %v343
  %385 = vmatprep.subr.mxu0 %v348
  %386 = vmatpush1.msra.mxu0 %v347
  %387 = vmatprep.subr.mxu0 %v352
  %388 = vmatpush1.msra.mxu0 %v351
  %389 = vmatprep.subr.mxu0 %v356
  %390 = vmatpush1.msra.mxu0 %v355
  %391 = vmatprep.subr.mxu0 0.0
  %392 = vmatpush1.msra.mxu0 0.0
  %393 = vmatprep.subr.mxu0 0.0
  %394 = vmatpush1.msra.mxu0 0.0
  %395 = vmatprep.subr.mxu0 0.0
  %396 = vmatpush1.msra.mxu0 0.0
  %397 = vmatprep.subr.mxu0 0.0
  %398 = vmatpush1.msra.mxu0 0.0
  %399 = vmatprep.subr.mxu0 0.0
  %400 = vmatpush1.msra.mxu0 0.0
  %401 = vmatprep.subr.mxu0 0.0
  %402 = vmatpush1.msra.mxu0 0.0
  %403 = vmatprep.subr.mxu0 0.0
  %404 = vmatpush1.msra.mxu0 0.0
  %405 = vmatprep.subr.mxu0 0.0
  %406 = vmatpush1.msra.mxu0 0.0
  %407 = vmatprep.subr.mxu0 0.0
  %408 = vmatpush1.msra.mxu0 0.0
  %409 = vmatprep.subr.mxu0 0.0
  %410 = vmatpush1.msra.mxu0 0.0
  %411 = vmatprep.subr.mxu0 0.0
  %412 = vmatpush1.msra.mxu0 0.0
  %413 = vmatprep.subr.mxu0 0.0
  %414 = vmatpush1.msra.mxu0 0.0
  %415 = vmatprep.subr.mxu0 0.0
  %416 = vmatpush1.msra.mxu0 0.0
  %417 = vmatprep.subr.mxu0 0.0
  %418 = vmatpush1.msra.mxu0 0.0
  %419 = vmatprep.subr.mxu0 0.0
  %420 = vmatpush1.msra.mxu0 0.0
  %421 = vmatprep.subr.mxu0 0.0
  %422 = vmatpush1.msra.mxu0 0.0
  %423 = vmatprep.mubr.f32.mxu0 0.0
  %424 = vmatmul.mubr.f32.gmra.mrb[0].mxu0 %v291
  %v425 = vpop.f32.mrb[0].mxu0
  %v426 = vadd.f32 0.0, %v425
  %v427 = vpop.f32.mrb[0].mxu0
  %v428 = vadd.f32 0.0, %v427
  %429 = vdwg.mxu0
  %430 = vmatprep.subr.mxu0 %v298
  %431 = vmatpush1.msra.mxu0 %v297
  %432 = vmatprep.subr.mxu0 %v302
  %433 = vmatpush1.msra.mxu0 %v301
  %434 = vmatprep.subr.mxu0 %v306
  %435 = vmatpush1.msra.mxu0 %v305
  %436 = vmatprep.subr.mxu0 %v310
  %437 = vmatpush1.msra.mxu0 %v309
  %438 = vmatprep.subr.mxu0 %v314
  %439 = vmatpush1.msra.mxu0 %v313
  %440 = vmatprep.subr.mxu0 %v318
  %441 = vmatpush1.msra.mxu0 %v317
  %442 = vmatprep.subr.mxu0 %v322
  %443 = vmatpush1.msra.mxu0 %v321
  %444 = vmatprep.subr.mxu0 %v326
  %445 = vmatpush1.msra.mxu0 %v325
  %446 = vmatprep.subr.mxu0 %v330
  %447 = vmatpush1.msra.mxu0 %v329
  %448 = vmatprep.subr.mxu0 %v334
  %449 = vmatpush1.msra.mxu0 %v333
  %450 = vmatprep.subr.mxu0 %v338
  %451 = vmatpush1.msra.mxu0 %v337
  %452 = vmatprep.subr.mxu0 %v342
  %453 = vmatpush1.msra.mxu0 %v341
  %454 = vmatprep.subr.mxu0 %v346
  %455 = vmatpush1.msra.mxu0 %v345
  %456 = vmatprep.subr.mxu0 %v350
  %457 = vmatpush1.msra.mxu0 %v349
  %458 = vmatprep.subr.mxu0 %v354
  %459 = vmatpush1.msra.mxu0 %v353
  %460 = vmatprep.subr.mxu0 %v358
  %461 = vmatpush1.msra.mxu0 %v357
  %462 = vmatprep.subr.mxu0 0.0
  %463 = vmatpush1.msra.mxu0 0.0
  %464 = vmatprep.subr.mxu0 0.0
  %465 = vmatpush1.msra.mxu0 0.0
  %466 = vmatprep.subr.mxu0 0.0
  %467 = vmatpush1.msra.mxu0 0.0
  %468 = vmatprep.subr.mxu0 0.0
  %469 = vmatpush1.msra.mxu0 0.0
  %470 = vmatprep.subr.mxu0 0.0
  %471 = vmatpush1.msra.mxu0 0.0
  %472 = vmatprep.subr.mxu0 0.0
  %473 = vmatpush1.msra.mxu0 0.0
  %474 = vmatprep.subr.mxu0 0.0
  %475 = vmatpush1.msra.mxu0 0.0
  %476 = vmatprep.subr.mxu0 0.0
  %477 = vmatpush1.msra.mxu0 0.0
  %478 = vmatprep.subr.mxu0 0.0
  %479 = vmatpush1.msra.mxu0 0.0
  %480 = vmatprep.subr.mxu0 0.0
  %481 = vmatpush1.msra.mxu0 0.0
  %482 = vmatprep.subr.mxu0 0.0
  %483 = vmatpush1.msra.mxu0 0.0
  %484 = vmatprep.subr.mxu0 0.0
  %485 = vmatpush1.msra.mxu0 0.0
  %486 = vmatprep.subr.mxu0 0.0
  %487 = vmatpush1.msra.mxu0 0.0
  %488 = vmatprep.subr.mxu0 0.0
  %489 = vmatpush1.msra.mxu0 0.0
  %490 = vmatprep.subr.mxu0 0.0
  %491 = vmatpush1.msra.mxu0 0.0
  %492 = vmatprep.subr.mxu0 0.0
  %493 = vmatpush1.msra.mxu0 0.0
  %494 = vmatprep.mubr.f32.mxu0 0.0
  %495 = vmatmul.mubr.f32.gmra.mrb[0].mxu0 %v291
  %v496 = vpop.f32.mrb[0].mxu0
  %v497 = vadd.f32 0.0, %v496
  %v498 = vpop.f32.mrb[0].mxu0
  %v499 = vadd.f32 0.0, %v498
  %500 = vdwg.mxu0
  %v505 = vcombine.low %v426, %v428
  %v506 = vcombine.low %v497, %v499
  %v508 = vunpack.c.l.s4 1983009808
  %v509 = vunpack.c.0.s8 %v508
  %v510 = vlaneseq
  %v511 = vshrl.u32 %v510, 7
  %v512 = vsub.s32 %v509, %v511
  %v513 = vrot.slane %v505, %v512
  %v515 = vunpack.c.l.s4 1983009808
  %v516 = vunpack.c.0.s8 %v515
  %v517 = vlaneseq
  %v518 = vshrl.u32 %v517, 7
  %v519 = vsub.s32 %v516, %v518
  %v520 = vrot.slane %v506, %v519
  %v521 = vcombine.low %v513, %v520
  %v523 = vadd.f32 %v294, %v521
  %v524 = vxor.u32 %v523, 2147483648
  %v525 = vmul.f32 %v524, 1.442695
  %v526 = vpow.pop %v525
  %v527 = vadd.f32 %v526, 1.0
  %v528 = vrcp.pop %v527
  %v529 = vmul.f32 1.0, %v528
  %v531 = vrot.slane %v523, 2
  %v533 = vxor.u32 %v531, 2147483648
  %v534 = vmul.f32 %v533, 1.442695
  %v535 = vpow.pop %v534
  %v536 = vadd.f32 %v535, 1.0
  %v537 = vrcp.pop %v536
  %v538 = vmul.f32 1.0, %v537
  %v539 = vrot.slane %v523, 4
  %v541 = vtanh.pop %v539
  %v542 = vrot.slane %v523, 6
  %v544 = vxor.u32 %v542, 2147483648
  %v545 = vmul.f32 %v544, 1.442695
  %v546 = vpow.pop %v545
  %v547 = vadd.f32 %v546, 1.0
  %v548 = vrcp.pop %v547
  %v549 = vmul.f32 1.0, %v548
  %v550 = vmul.f32 %v538, %v292
  %v551 = vmul.f32 %v529, %v541
  %v552 = vadd.f32 %v550, %v551
  %v553 = vtanh.pop %v552
  %v554 = vmul.f32 %v549, %v553
  %555 = vst [vmem:[#allocation2] sm:$0x3] %v554
  %556 = vst [vmem:[#allocation3] sm:$0x3] %v552
  %s557 = scalar_lea.vmem %s4, 2
  %558 = vst [vmem:[%s557] sm:$0x3] %v554
  %v559 = vld [vmem:[#allocation2] sm:$0x3]
  %v560 = vld [vmem:[#allocation3] sm:$0x3]
  %s561 = scalar_lea.vmem %s0, 16
  %v562 = vld [vmem:[%s561] sm:$0xff]
  %v563 = vld [vmem:[%s3] sm:$0xff]
  %v564 = vld [vmem:[%s3 + $0x8] sm:$0xff]
  %v565 = vld [vmem:[%s3 + $0x10] sm:$0xff]
  %v566 = vld [vmem:[%s3 + $0x18] sm:$0xff]
  %v567 = vld [vmem:[%s3 + $0x20] sm:$0xff]
  %v568 = vld [vmem:[%s3 + $0x28] sm:$0xff]
  %v569 = vld [vmem:[%s3 + $0x30] sm:$0xff]
  %v570 = vld [vmem:[%s3 + $0x38] sm:$0xff]
  %v571 = vld [vmem:[%s3 + $0x40] sm:$0xff]
  %v572 = vld [vmem:[%s3 + $0x48] sm:$0xff]
  %v573 = vld [vmem:[%s3 + $0x50] sm:$0xff]
  %v574 = vld [vmem:[%s3 + $0x58] sm:$0xff]
  %v575 = vld [vmem:[%s3 + $0x60] sm:$0xff]
  %v576 = vld [vmem:[%s3 + $0x68] sm:$0xff]
  %v577 = vld [vmem:[%s3 + $0x70] sm:$0xff]
  %v578 = vld [vmem:[%s3 + $0x78] sm:$0xff]
  %v579 = vld [vmem:[%s3 + $0x80] sm:$0xff]
  %v580 = vld [vmem:[%s3 + $0x88] sm:$0xff]
  %v581 = vld [vmem:[%s3 + $0x90] sm:$0xff]
  %v582 = vld [vmem:[%s3 + $0x98] sm:$0xff]
  %v583 = vld [vmem:[%s3 + $0xa0] sm:$0xff]
  %v584 = vld [vmem:[%s3 + $0xa8] sm:$0xff]
  %v585 = vld [vmem:[%s3 + $0xb0] sm:$0xff]
  %v586 = vld [vmem:[%s3 + $0xb8] sm:$0xff]
  %v587 = vld [vmem:[%s3 + $0xc0] sm:$0xff]
  %v588 = vld [vmem:[%s3 + $0xc8] sm:$0xff]
  %v589 = vld [vmem:[%s3 + $0xd0] sm:$0xff]
  %v590 = vld [vmem:[%s3 + $0xd8] sm:$0xff]
  %v591 = vld [vmem:[%s3 + $0xe0] sm:$0xff]
  %v592 = vld [vmem:[%s3 + $0xe8] sm:$0xff]
  %v593 = vld [vmem:[%s3 + $0xf0] sm:$0xff]
  %v594 = vld [vmem:[%s3 + $0xf8] sm:$0xff]
  %v595 = vld [vmem:[%s3 + $0x100] sm:$0xff]
  %v596 = vld [vmem:[%s3 + $0x108] sm:$0xff]
  %v597 = vld [vmem:[%s3 + $0x110] sm:$0xff]
  %v598 = vld [vmem:[%s3 + $0x118] sm:$0xff]
  %v599 = vld [vmem:[%s3 + $0x120] sm:$0xff]
  %v600 = vld [vmem:[%s3 + $0x128] sm:$0xff]
  %v601 = vld [vmem:[%s3 + $0x130] sm:$0xff]
  %v602 = vld [vmem:[%s3 + $0x138] sm:$0xff]
  %v603 = vld [vmem:[%s3 + $0x140] sm:$0xff]
  %v604 = vld [vmem:[%s3 + $0x148] sm:$0xff]
  %v605 = vld [vmem:[%s3 + $0x150] sm:$0xff]
  %v606 = vld [vmem:[%s3 + $0x158] sm:$0xff]
  %v607 = vld [vmem:[%s3 + $0x160] sm:$0xff]
  %v608 = vld [vmem:[%s3 + $0x168] sm:$0xff]
  %v609 = vld [vmem:[%s3 + $0x170] sm:$0xff]
  %v610 = vld [vmem:[%s3 + $0x178] sm:$0xff]
  %v611 = vld [vmem:[%s3 + $0x180] sm:$0xff]
  %v612 = vld [vmem:[%s3 + $0x188] sm:$0xff]
  %v613 = vld [vmem:[%s3 + $0x190] sm:$0xff]
  %v614 = vld [vmem:[%s3 + $0x198] sm:$0xff]
  %v615 = vld [vmem:[%s3 + $0x1a0] sm:$0xff]
  %v616 = vld [vmem:[%s3 + $0x1a8] sm:$0xff]
  %v617 = vld [vmem:[%s3 + $0x1b0] sm:$0xff]
  %v618 = vld [vmem:[%s3 + $0x1b8] sm:$0xff]
  %v619 = vld [vmem:[%s3 + $0x1c0] sm:$0xff]
  %v620 = vld [vmem:[%s3 + $0x1c8] sm:$0xff]
  %v621 = vld [vmem:[%s3 + $0x1d0] sm:$0xff]
  %v622 = vld [vmem:[%s3 + $0x1d8] sm:$0xff]
  %v623 = vld [vmem:[%s3 + $0x1e0] sm:$0xff]
  %v624 = vld [vmem:[%s3 + $0x1e8] sm:$0xff]
  %v625 = vld [vmem:[%s3 + $0x1f0] sm:$0xff]
  %v626 = vld [vmem:[%s3 + $0x1f8] sm:$0xff]
  %627 = vmatprep.subr.mxu0 %v564
  %628 = vmatpush1.msra.mxu0 %v563
  %629 = vmatprep.subr.mxu0 %v568
  %630 = vmatpush1.msra.mxu0 %v567
  %631 = vmatprep.subr.mxu0 %v572
  %632 = vmatpush1.msra.mxu0 %v571
  %633 = vmatprep.subr.mxu0 %v576
  %634 = vmatpush1.msra.mxu0 %v575
  %635 = vmatprep.subr.mxu0 %v580
  %636 = vmatpush1.msra.mxu0 %v579
  %637 = vmatprep.subr.mxu0 %v584
  %638 = vmatpush1.msra.mxu0 %v583
  %639 = vmatprep.subr.mxu0 %v588
  %640 = vmatpush1.msra.mxu0 %v587
  %641 = vmatprep.subr.mxu0 %v592
  %642 = vmatpush1.msra.mxu0 %v591
  %643 = vmatprep.subr.mxu0 %v596
  %644 = vmatpush1.msra.mxu0 %v595
  %645 = vmatprep.subr.mxu0 %v600
  %646 = vmatpush1.msra.mxu0 %v599
  %647 = vmatprep.subr.mxu0 %v604
  %648 = vmatpush1.msra.mxu0 %v603
  %649 = vmatprep.subr.mxu0 %v608
  %650 = vmatpush1.msra.mxu0 %v607
  %651 = vmatprep.subr.mxu0 %v612
  %652 = vmatpush1.msra.mxu0 %v611
  %653 = vmatprep.subr.mxu0 %v616
  %654 = vmatpush1.msra.mxu0 %v615
  %655 = vmatprep.subr.mxu0 %v620
  %656 = vmatpush1.msra.mxu0 %v619
  %657 = vmatprep.subr.mxu0 %v624
  %658 = vmatpush1.msra.mxu0 %v623
  %659 = vmatprep.subr.mxu0 0.0
  %660 = vmatpush1.msra.mxu0 0.0
  %661 = vmatprep.subr.mxu0 0.0
  %662 = vmatpush1.msra.mxu0 0.0
  %663 = vmatprep.subr.mxu0 0.0
  %664 = vmatpush1.msra.mxu0 0.0
  %665 = vmatprep.subr.mxu0 0.0
  %666 = vmatpush1.msra.mxu0 0.0
  %667 = vmatprep.subr.mxu0 0.0
  %668 = vmatpush1.msra.mxu0 0.0
  %669 = vmatprep.subr.mxu0 0.0
  %670 = vmatpush1.msra.mxu0 0.0
  %671 = vmatprep.subr.mxu0 0.0
  %672 = vmatpush1.msra.mxu0 0.0
  %673 = vmatprep.subr.mxu0 0.0
  %674 = vmatpush1.msra.mxu0 0.0
  %675 = vmatprep.subr.mxu0 0.0
  %676 = vmatpush1.msra.mxu0 0.0
  %677 = vmatprep.subr.mxu0 0.0
  %678 = vmatpush1.msra.mxu0 0.0
  %679 = vmatprep.subr.mxu0 0.0
  %680 = vmatpush1.msra.mxu0 0.0
  %681 = vmatprep.subr.mxu0 0.0
  %682 = vmatpush1.msra.mxu0 0.0
  %683 = vmatprep.subr.mxu0 0.0
  %684 = vmatpush1.msra.mxu0 0.0
  %685 = vmatprep.subr.mxu0 0.0
  %686 = vmatpush1.msra.mxu0 0.0
  %687 = vmatprep.subr.mxu0 0.0
  %688 = vmatpush1.msra.mxu0 0.0
  %689 = vmatprep.subr.mxu0 0.0
  %690 = vmatpush1.msra.mxu0 0.0
  %691 = vmatprep.mubr.f32.mxu0 0.0
  %692 = vmatmul.mubr.f32.gmra.mrb[0].mxu0 %v559
  %v693 = vpop.f32.mrb[0].mxu0
  %v694 = vadd.f32 0.0, %v693
  %v695 = vpop.f32.mrb[0].mxu0
  %v696 = vadd.f32 0.0, %v695
  %697 = vdwg.mxu0
  %698 = vmatprep.subr.mxu0 %v566
  %699 = vmatpush1.msra.mxu0 %v565
  %700 = vmatprep.subr.mxu0 %v570
  %701 = vmatpush1.msra.mxu0 %v569
  %702 = vmatprep.subr.mxu0 %v574
  %703 = vmatpush1.msra.mxu0 %v573
  %704 = vmatprep.subr.mxu0 %v578
  %705 = vmatpush1.msra.mxu0 %v577
  %706 = vmatprep.subr.mxu0 %v582
  %707 = vmatpush1.msra.mxu0 %v581
  %708 = vmatprep.subr.mxu0 %v586
  %709 = vmatpush1.msra.mxu0 %v585
  %710 = vmatprep.subr.mxu0 %v590
  %711 = vmatpush1.msra.mxu0 %v589
  %712 = vmatprep.subr.mxu0 %v594
  %713 = vmatpush1.msra.mxu0 %v593
  %714 = vmatprep.subr.mxu0 %v598
  %715 = vmatpush1.msra.mxu0 %v597
  %716 = vmatprep.subr.mxu0 %v602
  %717 = vmatpush1.msra.mxu0 %v601
  %718 = vmatprep.subr.mxu0 %v606
  %719 = vmatpush1.msra.mxu0 %v605
  %720 = vmatprep.subr.mxu0 %v610
  %721 = vmatpush1.msra.mxu0 %v609
  %722 = vmatprep.subr.mxu0 %v614
  %723 = vmatpush1.msra.mxu0 %v613
  %724 = vmatprep.subr.mxu0 %v618
  %725 = vmatpush1.msra.mxu0 %v617
  %726 = vmatprep.subr.mxu0 %v622
  %727 = vmatpush1.msra.mxu0 %v621
  %728 = vmatprep.subr.mxu0 %v626
  %729 = vmatpush1.msra.mxu0 %v625
  %730 = vmatprep.subr.mxu0 0.0
  %731 = vmatpush1.msra.mxu0 0.0
  %732 = vmatprep.subr.mxu0 0.0
  %733 = vmatpush1.msra.mxu0 0.0
  %734 = vmatprep.subr.mxu0 0.0
  %735 = vmatpush1.msra.mxu0 0.0
  %736 = vmatprep.subr.mxu0 0.0
  %737 = vmatpush1.msra.mxu0 0.0
  %738 = vmatprep.subr.mxu0 0.0
  %739 = vmatpush1.msra.mxu0 0.0
  %740 = vmatprep.subr.mxu0 0.0
  %741 = vmatpush1.msra.mxu0 0.0
  %742 = vmatprep.subr.mxu0 0.0
  %743 = vmatpush1.msra.mxu0 0.0
  %744 = vmatprep.subr.mxu0 0.0
  %745 = vmatpush1.msra.mxu0 0.0
  %746 = vmatprep.subr.mxu0 0.0
  %747 = vmatpush1.msra.mxu0 0.0
  %748 = vmatprep.subr.mxu0 0.0
  %749 = vmatpush1.msra.mxu0 0.0
  %750 = vmatprep.subr.mxu0 0.0
  %751 = vmatpush1.msra.mxu0 0.0
  %752 = vmatprep.subr.mxu0 0.0
  %753 = vmatpush1.msra.mxu0 0.0
  %754 = vmatprep.subr.mxu0 0.0
  %755 = vmatpush1.msra.mxu0 0.0
  %756 = vmatprep.subr.mxu0 0.0
  %757 = vmatpush1.msra.mxu0 0.0
  %758 = vmatprep.subr.mxu0 0.0
  %759 = vmatpush1.msra.mxu0 0.0
  %760 = vmatprep.subr.mxu0 0.0
  %761 = vmatpush1.msra.mxu0 0.0
  %762 = vmatprep.mubr.f32.mxu0 0.0
  %763 = vmatmul.mubr.f32.gmra.mrb[0].mxu0 %v559
  %v764 = vpop.f32.mrb[0].mxu0
  %v765 = vadd.f32 0.0, %v764
  %v766 = vpop.f32.mrb[0].mxu0
  %v767 = vadd.f32 0.0, %v766
  %768 = vdwg.mxu0
  %v773 = vcombine.low %v694, %v696
  %v774 = vcombine.low %v765, %v767
  %v776 = vunpack.c.l.s4 1983009808
  %v777 = vunpack.c.0.s8 %v776
  %v778 = vlaneseq
  %v779 = vshrl.u32 %v778, 7
  %v780 = vsub.s32 %v777, %v779
  %v781 = vrot.slane %v773, %v780
  %v783 = vunpack.c.l.s4 1983009808
  %v784 = vunpack.c.0.s8 %v783
  %v785 = vlaneseq
  %v786 = vshrl.u32 %v785, 7
  %v787 = vsub.s32 %v784, %v786
  %v788 = vrot.slane %v774, %v787
  %v789 = vcombine.low %v781, %v788
  %v791 = vadd.f32 %v562, %v789
  %v792 = vxor.u32 %v791, 2147483648
  %v793 = vmul.f32 %v792, 1.442695
  %v794 = vpow.pop %v793
  %v795 = vadd.f32 %v794, 1.0
  %v796 = vrcp.pop %v795
  %v797 = vmul.f32 1.0, %v796
  %v799 = vrot.slane %v791, 2
  %v801 = vxor.u32 %v799, 2147483648
  %v802 = vmul.f32 %v801, 1.442695
  %v803 = vpow.pop %v802
  %v804 = vadd.f32 %v803, 1.0
  %v805 = vrcp.pop %v804
  %v806 = vmul.f32 1.0, %v805
  %v807 = vrot.slane %v791, 4
  %v809 = vtanh.pop %v807
  %v810 = vrot.slane %v791, 6
  %v812 = vxor.u32 %v810, 2147483648
  %v813 = vmul.f32 %v812, 1.442695
  %v814 = vpow.pop %v813
  %v815 = vadd.f32 %v814, 1.0
  %v816 = vrcp.pop %v815
  %v817 = vmul.f32 1.0, %v816
  %v818 = vmul.f32 %v806, %v560
  %v819 = vmul.f32 %v797, %v809
  %v820 = vadd.f32 %v818, %v819
  %v821 = vtanh.pop %v820
  %v822 = vmul.f32 %v817, %v821
  %823 = vst [vmem:[#allocation2] sm:$0x3] %v822
  %824 = vst [vmem:[#allocation3] sm:$0x3] %v820
  %s825 = scalar_lea.vmem %s4, 4
  %826 = vst [vmem:[%s825] sm:$0x3] %v822
  %v827 = vld [vmem:[#allocation2] sm:$0x3]
  %v828 = vld [vmem:[#allocation3] sm:$0x3]
  %s829 = scalar_lea.vmem %s0, 24
  %v830 = vld [vmem:[%s829] sm:$0xff]
  %v831 = vld [vmem:[%s3] sm:$0xff]
  %v832 = vld [vmem:[%s3 + $0x8] sm:$0xff]
  %v833 = vld [vmem:[%s3 + $0x10] sm:$0xff]
  %v834 = vld [vmem:[%s3 + $0x18] sm:$0xff]
  %v835 = vld [vmem:[%s3 + $0x20] sm:$0xff]
  %v836 = vld [vmem:[%s3 + $0x28] sm:$0xff]
  %v837 = vld [vmem:[%s3 + $0x30] sm:$0xff]
  %v838 = vld [vmem:[%s3 + $0x38] sm:$0xff]
  %v839 = vld [vmem:[%s3 + $0x40] sm:$0xff]
  %v840 = vld [vmem:[%s3 + $0x48] sm:$0xff]
  %v841 = vld [vmem:[%s3 + $0x50] sm:$0xff]
  %v842 = vld [vmem:[%s3 + $0x58] sm:$0xff]
  %v843 = vld [vmem:[%s3 + $0x60] sm:$0xff]
  %v844 = vld [vmem:[%s3 + $0x68] sm:$0xff]
  %v845 = vld [vmem:[%s3 + $0x70] sm:$0xff]
  %v846 = vld [vmem:[%s3 + $0x78] sm:$0xff]
  %v847 = vld [vmem:[%s3 + $0x80] sm:$0xff]
  %v848 = vld [vmem:[%s3 + $0x88] sm:$0xff]
  %v849 = vld [vmem:[%s3 + $0x90] sm:$0xff]
  %v850 = vld [vmem:[%s3 + $0x98] sm:$0xff]
  %v851 = vld [vmem:[%s3 + $0xa0] sm:$0xff]
  %v852 = vld [vmem:[%s3 + $0xa8] sm:$0xff]
  %v853 = vld [vmem:[%s3 + $0xb0] sm:$0xff]
  %v854 = vld [vmem:[%s3 + $0xb8] sm:$0xff]
  %v855 = vld [vmem:[%s3 + $0xc0] sm:$0xff]
  %v856 = vld [vmem:[%s3 + $0xc8] sm:$0xff]
  %v857 = vld [vmem:[%s3 + $0xd0] sm:$0xff]
  %v858 = vld [vmem:[%s3 + $0xd8] sm:$0xff]
  %v859 = vld [vmem:[%s3 + $0xe0] sm:$0xff]
  %v860 = vld [vmem:[%s3 + $0xe8] sm:$0xff]
  %v861 = vld [vmem:[%s3 + $0xf0] sm:$0xff]
  %v862 = vld [vmem:[%s3 + $0xf8] sm:$0xff]
  %v863 = vld [vmem:[%s3 + $0x100] sm:$0xff]
  %v864 = vld [vmem:[%s3 + $0x108] sm:$0xff]
  %v865 = vld [vmem:[%s3 + $0x110] sm:$0xff]
  %v866 = vld [vmem:[%s3 + $0x118] sm:$0xff]
  %v867 = vld [vmem:[%s3 + $0x120] sm:$0xff]
  %v868 = vld [vmem:[%s3 + $0x128] sm:$0xff]
  %v869 = vld [vmem:[%s3 + $0x130] sm:$0xff]
  %v870 = vld [vmem:[%s3 + $0x138] sm:$0xff]
  %v871 = vld [vmem:[%s3 + $0x140] sm:$0xff]
  %v872 = vld [vmem:[%s3 + $0x148] sm:$0xff]
  %v873 = vld [vmem:[%s3 + $0x150] sm:$0xff]
  %v874 = vld [vmem:[%s3 + $0x158] sm:$0xff]
  %v875 = vld [vmem:[%s3 + $0x160] sm:$0xff]
  %v876 = vld [vmem:[%s3 + $0x168] sm:$0xff]
  %v877 = vld [vmem:[%s3 + $0x170] sm:$0xff]
  %v878 = vld [vmem:[%s3 + $0x178] sm:$0xff]
  %v879 = vld [vmem:[%s3 + $0x180] sm:$0xff]
  %v880 = vld [vmem:[%s3 + $0x188] sm:$0xff]
  %v881 = vld [vmem:[%s3 + $0x190] sm:$0xff]
  %v882 = vld [vmem:[%s3 + $0x198] sm:$0xff]
  %v883 = vld [vmem:[%s3 + $0x1a0] sm:$0xff]
  %v884 = vld [vmem:[%s3 + $0x1a8] sm:$0xff]
  %v885 = vld [vmem:[%s3 + $0x1b0] sm:$0xff]
  %v886 = vld [vmem:[%s3 + $0x1b8] sm:$0xff]
  %v887 = vld [vmem:[%s3 + $0x1c0] sm:$0xff]
  %v888 = vld [vmem:[%s3 + $0x1c8] sm:$0xff]
  %v889 = vld [vmem:[%s3 + $0x1d0] sm:$0xff]
  %v890 = vld [vmem:[%s3 + $0x1d8] sm:$0xff]
  %v891 = vld [vmem:[%s3 + $0x1e0] sm:$0xff]
  %v892 = vld [vmem:[%s3 + $0x1e8] sm:$0xff]
  %v893 = vld [vmem:[%s3 + $0x1f0] sm:$0xff]
  %v894 = vld [vmem:[%s3 + $0x1f8] sm:$0xff]
  %895 = vmatprep.subr.mxu0 %v832
  %896 = vmatpush1.msra.mxu0 %v831
  %897 = vmatprep.subr.mxu0 %v836
  %898 = vmatpush1.msra.mxu0 %v835
  %899 = vmatprep.subr.mxu0 %v840
  %900 = vmatpush1.msra.mxu0 %v839
  %901 = vmatprep.subr.mxu0 %v844
  %902 = vmatpush1.msra.mxu0 %v843
  %903 = vmatprep.subr.mxu0 %v848
  %904 = vmatpush1.msra.mxu0 %v847
  %905 = vmatprep.subr.mxu0 %v852
  %906 = vmatpush1.msra.mxu0 %v851
  %907 = vmatprep.subr.mxu0 %v856
  %908 = vmatpush1.msra.mxu0 %v855
  %909 = vmatprep.subr.mxu0 %v860
  %910 = vmatpush1.msra.mxu0 %v859
  %911 = vmatprep.subr.mxu0 %v864
  %912 = vmatpush1.msra.mxu0 %v863
  %913 = vmatprep.subr.mxu0 %v868
  %914 = vmatpush1.msra.mxu0 %v867
  %915 = vmatprep.subr.mxu0 %v872
  %916 = vmatpush1.msra.mxu0 %v871
  %917 = vmatprep.subr.mxu0 %v876
  %918 = vmatpush1.msra.mxu0 %v875
  %919 = vmatprep.subr.mxu0 %v880
  %920 = vmatpush1.msra.mxu0 %v879
  %921 = vmatprep.subr.mxu0 %v884
  %922 = vmatpush1.msra.mxu0 %v883
  %923 = vmatprep.subr.mxu0 %v888
  %924 = vmatpush1.msra.mxu0 %v887
  %925 = vmatprep.subr.mxu0 %v892
  %926 = vmatpush1.msra.mxu0 %v891
  %927 = vmatprep.subr.mxu0 0.0
  %928 = vmatpush1.msra.mxu0 0.0
  %929 = vmatprep.subr.mxu0 0.0
  %930 = vmatpush1.msra.mxu0 0.0
  %931 = vmatprep.subr.mxu0 0.0
  %932 = vmatpush1.msra.mxu0 0.0
  %933 = vmatprep.subr.mxu0 0.0
  %934 = vmatpush1.msra.mxu0 0.0
  %935 = vmatprep.subr.mxu0 0.0
  %936 = vmatpush1.msra.mxu0 0.0
  %937 = vmatprep.subr.mxu0 0.0
  %938 = vmatpush1.msra.mxu0 0.0
  %939 = vmatprep.subr.mxu0 0.0
  %940 = vmatpush1.msra.mxu0 0.0
  %941 = vmatprep.subr.mxu0 0.0
  %942 = vmatpush1.msra.mxu0 0.0
  %943 = vmatprep.subr.mxu0 0.0
  %944 = vmatpush1.msra.mxu0 0.0
  %945 = vmatprep.subr.mxu0 0.0
  %946 = vmatpush1.msra.mxu0 0.0
  %947 = vmatprep.subr.mxu0 0.0
  %948 = vmatpush1.msra.mxu0 0.0
  %949 = vmatprep.subr.mxu0 0.0
  %950 = vmatpush1.msra.mxu0 0.0
  %951 = vmatprep.subr.mxu0 0.0
  %952 = vmatpush1.msra.mxu0 0.0
  %953 = vmatprep.subr.mxu0 0.0
  %954 = vmatpush1.msra.mxu0 0.0
  %955 = vmatprep.subr.mxu0 0.0
  %956 = vmatpush1.msra.mxu0 0.0
  %957 = vmatprep.subr.mxu0 0.0
  %958 = vmatpush1.msra.mxu0 0.0
  %959 = vmatprep.mubr.f32.mxu0 0.0
  %960 = vmatmul.mubr.f32.gmra.mrb[0].mxu0 %v827
  %v961 = vpop.f32.mrb[0].mxu0
  %v962 = vadd.f32 0.0, %v961
  %v963 = vpop.f32.mrb[0].mxu0
  %v964 = vadd.f32 0.0, %v963
  %965 = vdwg.mxu0
  %966 = vmatprep.subr.mxu0 %v834
  %967 = vmatpush1.msra.mxu0 %v833
  %968 = vmatprep.subr.mxu0 %v838
  %969 = vmatpush1.msra.mxu0 %v837
  %970 = vmatprep.subr.mxu0 %v842
  %971 = vmatpush1.msra.mxu0 %v841
  %972 = vmatprep.subr.mxu0 %v846
  %973 = vmatpush1.msra.mxu0 %v845
  %974 = vmatprep.subr.mxu0 %v850
  %975 = vmatpush1.msra.mxu0 %v849
  %976 = vmatprep.subr.mxu0 %v854
  %977 = vmatpush1.msra.mxu0 %v853
  %978 = vmatprep.subr.mxu0 %v858
  %979 = vmatpush1.msra.mxu0 %v857
  %980 = vmatprep.subr.mxu0 %v862
  %981 = vmatpush1.msra.mxu0 %v861
  %982 = vmatprep.subr.mxu0 %v866
  %983 = vmatpush1.msra.mxu0 %v865
  %984 = vmatprep.subr.mxu0 %v870
  %985 = vmatpush1.msra.mxu0 %v869
  %986 = vmatprep.subr.mxu0 %v874
  %987 = vmatpush1.msra.mxu0 %v873
  %988 = vmatprep.subr.mxu0 %v878
  %989 = vmatpush1.msra.mxu0 %v877
  %990 = vmatprep.subr.mxu0 %v882
  %991 = vmatpush1.msra.mxu0 %v881
  %992 = vmatprep.subr.mxu0 %v886
  %993 = vmatpush1.msra.mxu0 %v885
  %994 = vmatprep.subr.mxu0 %v890
  %995 = vmatpush1.msra.mxu0 %v889
  %996 = vmatprep.subr.mxu0 %v894
  %997 = vmatpush1.msra.mxu0 %v893
  %998 = vmatprep.subr.mxu0 0.0
  %999 = vmatpush1.msra.mxu0 0.0
  %1000 = vmatprep.subr.mxu0 0.0
  %1001 = vmatpush1.msra.mxu0 0.0
  %1002 = vmatprep.subr.mxu0 0.0
  %1003 = vmatpush1.msra.mxu0 0.0
  %1004 = vmatprep.subr.mxu0 0.0
  %1005 = vmatpush1.msra.mxu0 0.0
  %1006 = vmatprep.subr.mxu0 0.0
  %1007 = vmatpush1.msra.mxu0 0.0
  %1008 = vmatprep.subr.mxu0 0.0
  %1009 = vmatpush1.msra.mxu0 0.0
  %1010 = vmatprep.subr.mxu0 0.0
  %1011 = vmatpush1.msra.mxu0 0.0
  %1012 = vmatprep.subr.mxu0 0.0
  %1013 = vmatpush1.msra.mxu0 0.0
  %1014 = vmatprep.subr.mxu0 0.0
  %1015 = vmatpush1.msra.mxu0 0.0
  %1016 = vmatprep.subr.mxu0 0.0
  %1017 = vmatpush1.msra.mxu0 0.0
  %1018 = vmatprep.subr.mxu0 0.0
  %1019 = vmatpush1.msra.mxu0 0.0
  %1020 = vmatprep.subr.mxu0 0.0
  %1021 = vmatpush1.msra.mxu0 0.0
  %1022 = vmatprep.subr.mxu0 0.0
  %1023 = vmatpush1.msra.mxu0 0.0
  %1024 = vmatprep.subr.mxu0 0.0
  %1025 = vmatpush1.msra.mxu0 0.0
  %1026 = vmatprep.subr.mxu0 0.0
  %1027 = vmatpush1.msra.mxu0 0.0
  %1028 = vmatprep.subr.mxu0 0.0
  %1029 = vmatpush1.msra.mxu0 0.0
  %1030 = vmatprep.mubr.f32.mxu0 0.0
  %1031 = vmatmul.mubr.f32.gmra.mrb[0].mxu0 %v827
  %v1032 = vpop.f32.mrb[0].mxu0
  %v1033 = vadd.f32 0.0, %v1032
  %v1034 = vpop.f32.mrb[0].mxu0
  %v1035 = vadd.f32 0.0, %v1034
  %1036 = vdwg.mxu0
  %v1041 = vcombine.low %v962, %v964
  %v1042 = vcombine.low %v1033, %v1035
  %v1044 = vunpack.c.l.s4 1983009808
  %v1045 = vunpack.c.0.s8 %v1044
  %v1046 = vlaneseq
  %v1047 = vshrl.u32 %v1046, 7
  %v1048 = vsub.s32 %v1045, %v1047
  %v1049 = vrot.slane %v1041, %v1048
  %v1051 = vunpack.c.l.s4 1983009808
  %v1052 = vunpack.c.0.s8 %v1051
  %v1053 = vlaneseq
  %v1054 = vshrl.u32 %v1053, 7
  %v1055 = vsub.s32 %v1052, %v1054
  %v1056 = vrot.slane %v1042, %v1055
  %v1057 = vcombine.low %v1049, %v1056
  %v1059 = vadd.f32 %v830, %v1057
  %v1060 = vxor.u32 %v1059, 2147483648
  %v1061 = vmul.f32 %v1060, 1.442695
  %v1062 = vpow.pop %v1061
  %v1063 = vadd.f32 %v1062, 1.0
  %v1064 = vrcp.pop %v1063
  %v1065 = vmul.f32 1.0, %v1064
  %v1067 = vrot.slane %v1059, 2
  %v1069 = vxor.u32 %v1067, 2147483648
  %v1070 = vmul.f32 %v1069, 1.442695
  %v1071 = vpow.pop %v1070
  %v1072 = vadd.f32 %v1071, 1.0
  %v1073 = vrcp.pop %v1072
  %v1074 = vmul.f32 1.0, %v1073
  %v1075 = vrot.slane %v1059, 4
  %v1077 = vtanh.pop %v1075
  %v1078 = vrot.slane %v1059, 6
  %v1080 = vxor.u32 %v1078, 2147483648
  %v1081 = vmul.f32 %v1080, 1.442695
  %v1082 = vpow.pop %v1081
  %v1083 = vadd.f32 %v1082, 1.0
  %v1084 = vrcp.pop %v1083
  %v1085 = vmul.f32 1.0, %v1084
  %v1086 = vmul.f32 %v1074, %v828
  %v1087 = vmul.f32 %v1065, %v1077
  %v1088 = vadd.f32 %v1086, %v1087
  %v1089 = vtanh.pop %v1088
  %v1090 = vmul.f32 %v1085, %v1089
  %1091 = vst [vmem:[#allocation2] sm:$0x3] %v1090
  %1092 = vst [vmem:[#allocation3] sm:$0x3] %v1088
  %s1093 = scalar_lea.vmem %s4, 6
  %1094 = vst [vmem:[%s1093] sm:$0x3] %v1090
  %v1095 = vld [vmem:[#allocation2] sm:$0x3]
  %v1096 = vld [vmem:[#allocation3] sm:$0x3]
  %s1097 = scalar_lea.vmem %s0, 32
  %v1098 = vld [vmem:[%s1097] sm:$0xff]
  %v1099 = vld [vmem:[%s3] sm:$0xff]
  %v1100 = vld [vmem:[%s3 + $0x8] sm:$0xff]
  %v1101 = vld [vmem:[%s3 + $0x10] sm:$0xff]
  %v1102 = vld [vmem:[%s3 + $0x18] sm:$0xff]
  %v1103 = vld [vmem:[%s3 + $0x20] sm:$0xff]
  %v1104 = vld [vmem:[%s3 + $0x28] sm:$0xff]
  %v1105 = vld [vmem:[%s3 + $0x30] sm:$0xff]
  %v1106 = vld [vmem:[%s3 + $0x38] sm:$0xff]
  %v1107 = vld [vmem:[%s3 + $0x40] sm:$0xff]
  %v1108 = vld [vmem:[%s3 + $0x48] sm:$0xff]
  %v1109 = vld [vmem:[%s3 + $0x50] sm:$0xff]
  %v1110 = vld [vmem:[%s3 + $0x58] sm:$0xff]
  %v1111 = vld [vmem:[%s3 + $0x60] sm:$0xff]
  %v1112 = vld [vmem:[%s3 + $0x68] sm:$0xff]
  %v1113 = vld [vmem:[%s3 + $0x70] sm:$0xff]
  %v1114 = vld [vmem:[%s3 + $0x78] sm:$0xff]
  %v1115 = vld [vmem:[%s3 + $0x80] sm:$0xff]
  %v1116 = vld [vmem:[%s3 + $0x88] sm:$0xff]
  %v1117 = vld [vmem:[%s3 + $0x90] sm:$0xff]
  %v1118 = vld [vmem:[%s3 + $0x98] sm:$0xff]
  %v1119 = vld [vmem:[%s3 + $0xa0] sm:$0xff]
  %v1120 = vld [vmem:[%s3 + $0xa8] sm:$0xff]
  %v1121 = vld [vmem:[%s3 + $0xb0] sm:$0xff]
  %v1122 = vld [vmem:[%s3 + $0xb8] sm:$0xff]
  %v1123 = vld [vmem:[%s3 + $0xc0] sm:$0xff]
  %v1124 = vld [vmem:[%s3 + $0xc8] sm:$0xff]
  %v1125 = vld [vmem:[%s3 + $0xd0] sm:$0xff]
  %v1126 = vld [vmem:[%s3 + $0xd8] sm:$0xff]
  %v1127 = vld [vmem:[%s3 + $0xe0] sm:$0xff]
  %v1128 = vld [vmem:[%s3 + $0xe8] sm:$0xff]
  %v1129 = vld [vmem:[%s3 + $0xf0] sm:$0xff]
  %v1130 = vld [vmem:[%s3 + $0xf8] sm:$0xff]
  %v1131 = vld [vmem:[%s3 + $0x100] sm:$0xff]
  %v1132 = vld [vmem:[%s3 + $0x108] sm:$0xff]
  %v1133 = vld [vmem:[%s3 + $0x110] sm:$0xff]
  %v1134 = vld [vmem:[%s3 + $0x118] sm:$0xff]
  %v1135 = vld [vmem:[%s3 + $0x120] sm:$0xff]
  %v1136 = vld [vmem:[%s3 + $0x128] sm:$0xff]
  %v1137 = vld [vmem:[%s3 + $0x130] sm:$0xff]
  %v1138 = vld [vmem:[%s3 + $0x138] sm:$0xff]
  %v1139 = vld [vmem:[%s3 + $0x140] sm:$0xff]
  %v1140 = vld [vmem:[%s3 + $0x148] sm:$0xff]
  %v1141 = vld [vmem:[%s3 + $0x150] sm:$0xff]
  %v1142 = vld [vmem:[%s3 + $0x158] sm:$0xff]
  %v1143 = vld [vmem:[%s3 + $0x160] sm:$0xff]
  %v1144 = vld [vmem:[%s3 + $0x168] sm:$0xff]
  %v1145 = vld [vmem:[%s3 + $0x170] sm:$0xff]
  %v1146 = vld [vmem:[%s3 + $0x178] sm:$0xff]
  %v1147 = vld [vmem:[%s3 + $0x180] sm:$0xff]
  %v1148 = vld [vmem:[%s3 + $0x188] sm:$0xff]
  %v1149 = vld [vmem:[%s3 + $0x190] sm:$0xff]
  %v1150 = vld [vmem:[%s3 + $0x198] sm:$0xff]
  %v1151 = vld [vmem:[%s3 + $0x1a0] sm:$0xff]
  %v1152 = vld [vmem:[%s3 + $0x1a8] sm:$0xff]
  %v1153 = vld [vmem:[%s3 + $0x1b0] sm:$0xff]
  %v1154 = vld [vmem:[%s3 + $0x1b8] sm:$0xff]
  %v1155 = vld [vmem:[%s3 + $0x1c0] sm:$0xff]
  %v1156 = vld [vmem:[%s3 + $0x1c8] sm:$0xff]
  %v1157 = vld [vmem:[%s3 + $0x1d0] sm:$0xff]
  %v1158 = vld [vmem:[%s3 + $0x1d8] sm:$0xff]
  %v1159 = vld [vmem:[%s3 + $0x1e0] sm:$0xff]
  %v1160 = vld [vmem:[%s3 + $0x1e8] sm:$0xff]
  %v1161 = vld [vmem:[%s3 + $0x1f0] sm:$0xff]
  %v1162 = vld [vmem:[%s3 + $0x1f8] sm:$0xff]
  %1163 = vmatprep.subr.mxu0 %v1100
  %1164 = vmatpush1.msra.mxu0 %v1099
  %1165 = vmatprep.subr.mxu0 %v1104
  %1166 = vmatpush1.msra.mxu0 %v1103
  %1167 = vmatprep.subr.mxu0 %v1108
  %1168 = vmatpush1.msra.mxu0 %v1107
  %1169 = vmatprep.subr.mxu0 %v1112
  %1170 = vmatpush1.msra.mxu0 %v1111
  %1171 = vmatprep.subr.mxu0 %v1116
  %1172 = vmatpush1.msra.mxu0 %v1115
  %1173 = vmatprep.subr.mxu0 %v1120
  %1174 = vmatpush1.msra.mxu0 %v1119
  %1175 = vmatprep.subr.mxu0 %v1124
  %1176 = vmatpush1.msra.mxu0 %v1123
  %1177 = vmatprep.subr.mxu0 %v1128
  %1178 = vmatpush1.msra.mxu0 %v1127
  %1179 = vmatprep.subr.mxu0 %v1132
  %1180 = vmatpush1.msra.mxu0 %v1131
  %1181 = vmatprep.subr.mxu0 %v1136
  %1182 = vmatpush1.msra.mxu0 %v1135
  %1183 = vmatprep.subr.mxu0 %v1140
  %1184 = vmatpush1.msra.mxu0 %v1139
  %1185 = vmatprep.subr.mxu0 %v1144
  %1186 = vmatpush1.msra.mxu0 %v1143
  %1187 = vmatprep.subr.mxu0 %v1148
  %1188 = vmatpush1.msra.mxu0 %v1147
  %1189 = vmatprep.subr.mxu0 %v1152
  %1190 = vmatpush1.msra.mxu0 %v1151
  %1191 = vmatprep.subr.mxu0 %v1156
  %1192 = vmatpush1.msra.mxu0 %v1155
  %1193 = vmatprep.subr.mxu0 %v1160
  %1194 = vmatpush1.msra.mxu0 %v1159
  %1195 = vmatprep.subr.mxu0 0.0
  %1196 = vmatpush1.msra.mxu0 0.0
  %1197 = vmatprep.subr.mxu0 0.0
  %1198 = vmatpush1.msra.mxu0 0.0
  %1199 = vmatprep.subr.mxu0 0.0
  %1200 = vmatpush1.msra.mxu0 0.0
  %1201 = vmatprep.subr.mxu0 0.0
  %1202 = vmatpush1.msra.mxu0 0.0
  %1203 = vmatprep.subr.mxu0 0.0
  %1204 = vmatpush1.msra.mxu0 0.0
  %1205 = vmatprep.subr.mxu0 0.0
  %1206 = vmatpush1.msra.mxu0 0.0
  %1207 = vmatprep.subr.mxu0 0.0
  %1208 = vmatpush1.msra.mxu0 0.0
  %1209 = vmatprep.subr.mxu0 0.0
  %1210 = vmatpush1.msra.mxu0 0.0
  %1211 = vmatprep.subr.mxu0 0.0
  %1212 = vmatpush1.msra.mxu0 0.0
  %1213 = vmatprep.subr.mxu0 0.0
  %1214 = vmatpush1.msra.mxu0 0.0
  %1215 = vmatprep.subr.mxu0 0.0
  %1216 = vmatpush1.msra.mxu0 0.0
  %1217 = vmatprep.subr.mxu0 0.0
  %1218 = vmatpush1.msra.mxu0 0.0
  %1219 = vmatprep.subr.mxu0 0.0
  %1220 = vmatpush1.msra.mxu0 0.0
  %1221 = vmatprep.subr.mxu0 0.0
  %1222 = vmatpush1.msra.mxu0 0.0
  %1223 = vmatprep.subr.mxu0 0.0
  %1224 = vmatpush1.msra.mxu0 0.0
  %1225 = vmatprep.subr.mxu0 0.0
  %1226 = vmatpush1.msra.mxu0 0.0
  %1227 = vmatprep.mubr.f32.mxu0 0.0
  %1228 = vmatmul.mubr.f32.gmra.mrb[0].mxu0 %v1095
  %v1229 = vpop.f32.mrb[0].mxu0
  %v1230 = vadd.f32 0.0, %v1229
  %v1231 = vpop.f32.mrb[0].mxu0
  %v1232 = vadd.f32 0.0, %v1231
  %1233 = vdwg.mxu0
  %1234 = vmatprep.subr.mxu0 %v1102
  %1235 = vmatpush1.msra.mxu0 %v1101
  %1236 = vmatprep.subr.mxu0 %v1106
  %1237 = vmatpush1.msra.mxu0 %v1105
  %1238 = vmatprep.subr.mxu0 %v1110
  %1239 = vmatpush1.msra.mxu0 %v1109
  %1240 = vmatprep.subr.mxu0 %v1114
  %1241 = vmatpush1.msra.mxu0 %v1113
  %1242 = vmatprep.subr.mxu0 %v1118
  %1243 = vmatpush1.msra.mxu0 %v1117
  %1244 = vmatprep.subr.mxu0 %v1122
  %1245 = vmatpush1.msra.mxu0 %v1121
  %1246 = vmatprep.subr.mxu0 %v1126
  %1247 = vmatpush1.msra.mxu0 %v1125
  %1248 = vmatprep.subr.mxu0 %v1130
  %1249 = vmatpush1.msra.mxu0 %v1129
  %1250 = vmatprep.subr.mxu0 %v1134
  %1251 = vmatpush1.msra.mxu0 %v1133
  %1252 = vmatprep.subr.mxu0 %v1138
  %1253 = vmatpush1.msra.mxu0 %v1137
  %1254 = vmatprep.subr.mxu0 %v1142
  %1255 = vmatpush1.msra.mxu0 %v1141
  %1256 = vmatprep.subr.mxu0 %v1146
  %1257 = vmatpush1.msra.mxu0 %v1145
  %1258 = vmatprep.subr.mxu0 %v1150
  %1259 = vmatpush1.msra.mxu0 %v1149
  %1260 = vmatprep.subr.mxu0 %v1154
  %1261 = vmatpush1.msra.mxu0 %v1153
  %1262 = vmatprep.subr.mxu0 %v1158
  %1263 = vmatpush1.msra.mxu0 %v1157
  %1264 = vmatprep.subr.mxu0 %v1162
  %1265 = vmatpush1.msra.mxu0 %v1161
  %1266 = vmatprep.subr.mxu0 0.0
  %1267 = vmatpush1.msra.mxu0 0.0
  %1268 = vmatprep.subr.mxu0 0.0
  %1269 = vmatpush1.msra.mxu0 0.0
  %1270 = vmatprep.subr.mxu0 0.0
  %1271 = vmatpush1.msra.mxu0 0.0
  %1272 = vmatprep.subr.mxu0 0.0
  %1273 = vmatpush1.msra.mxu0 0.0
  %1274 = vmatprep.subr.mxu0 0.0
  %1275 = vmatpush1.msra.mxu0 0.0
  %1276 = vmatprep.subr.mxu0 0.0
  %1277 = vmatpush1.msra.mxu0 0.0
  %1278 = vmatprep.subr.mxu0 0.0
  %1279 = vmatpush1.msra.mxu0 0.0
  %1280 = vmatprep.subr.mxu0 0.0
  %1281 = vmatpush1.msra.mxu0 0.0
  %1282 = vmatprep.subr.mxu0 0.0
  %1283 = vmatpush1.msra.mxu0 0.0
  %1284 = vmatprep.subr.mxu0 0.0
  %1285 = vmatpush1.msra.mxu0 0.0
  %1286 = vmatprep.subr.mxu0 0.0
  %1287 = vmatpush1.msra.mxu0 0.0
  %1288 = vmatprep.subr.mxu0 0.0
  %1289 = vmatpush1.msra.mxu0 0.0
  %1290 = vmatprep.subr.mxu0 0.0
  %1291 = vmatpush1.msra.mxu0 0.0
  %1292 = vmatprep.subr.mxu0 0.0
  %1293 = vmatpush1.msra.mxu0 0.0
  %1294 = vmatprep.subr.mxu0 0.0
  %1295 = vmatpush1.msra.mxu0 0.0
  %1296 = vmatprep.subr.mxu0 0.0
  %1297 = vmatpush1.msra.mxu0 0.0
  %1298 = vmatprep.mubr.f32.mxu0 0.0
  %1299 = vmatmul.mubr.f32.gmra.mrb[0].mxu0 %v1095
  %v1300 = vpop.f32.mrb[0].mxu0
  %v1301 = vadd.f32 0.0, %v1300
  %v1302 = vpop.f32.mrb[0].mxu0
  %v1303 = vadd.f32 0.0, %v1302
  %1304 = vdwg.mxu0
  %v1309 = vcombine.low %v1230, %v1232
  %v1310 = vcombine.low %v1301, %v1303
  %v1312 = vunpack.c.l.s4 1983009808
  %v1313 = vunpack.c.0.s8 %v1312
  %v1314 = vlaneseq
  %v1315 = vshrl.u32 %v1314, 7
  %v1316 = vsub.s32 %v1313, %v1315
  %v1317 = vrot.slane %v1309, %v1316
  %v1319 = vunpack.c.l.s4 1983009808
  %v1320 = vunpack.c.0.s8 %v1319
  %v1321 = vlaneseq
  %v1322 = vshrl.u32 %v1321, 7
  %v1323 = vsub.s32 %v1320, %v1322
  %v1324 = vrot.slane %v1310, %v1323
  %v1325 = vcombine.low %v1317, %v1324
  %v1327 = vadd.f32 %v1098, %v1325
  %v1328 = vxor.u32 %v1327, 2147483648
  %v1329 = vmul.f32 %v1328, 1.442695
  %v1330 = vpow.pop %v1329
  %v1331 = vadd.f32 %v1330, 1.0
  %v1332 = vrcp.pop %v1331
  %v1333 = vmul.f32 1.0, %v1332
  %v1335 = vrot.slane %v1327, 2
  %v1337 = vxor.u32 %v1335, 2147483648
  %v1338 = vmul.f32 %v1337, 1.442695
  %v1339 = vpow.pop %v1338
  %v1340 = vadd.f32 %v1339, 1.0
  %v1341 = vrcp.pop %v1340
  %v1342 = vmul.f32 1.0, %v1341
  %v1343 = vrot.slane %v1327, 4
  %v1345 = vtanh.pop %v1343
  %v1346 = vrot.slane %v1327, 6
  %v1348 = vxor.u32 %v1346, 2147483648
  %v1349 = vmul.f32 %v1348, 1.442695
  %v1350 = vpow.pop %v1349
  %v1351 = vadd.f32 %v1350, 1.0
  %v1352 = vrcp.pop %v1351
  %v1353 = vmul.f32 1.0, %v1352
  %v1354 = vmul.f32 %v1342, %v1096
  %v1355 = vmul.f32 %v1333, %v1345
  %v1356 = vadd.f32 %v1354, %v1355
  %v1357 = vtanh.pop %v1356
  %v1358 = vmul.f32 %v1353, %v1357
  %1359 = vst [vmem:[#allocation2] sm:$0x3] %v1358
  %1360 = vst [vmem:[#allocation3] sm:$0x3] %v1356
  %s1361 = scalar_lea.vmem %s4, 8
  %1362 = vst [vmem:[%s1361] sm:$0x3] %v1358
  %v1363 = vld [vmem:[#allocation2] sm:$0x3]
  %v1364 = vld [vmem:[#allocation3] sm:$0x3]
  %s1365 = scalar_lea.vmem %s0, 40
  %v1366 = vld [vmem:[%s1365] sm:$0xff]
  %v1367 = vld [vmem:[%s3] sm:$0xff]
  %v1368 = vld [vmem:[%s3 + $0x8] sm:$0xff]
  %v1369 = vld [vmem:[%s3 + $0x10] sm:$0xff]
  %v1370 = vld [vmem:[%s3 + $0x18] sm:$0xff]
  %v1371 = vld [vmem:[%s3 + $0x20] sm:$0xff]
  %v1372 = vld [vmem:[%s3 + $0x28] sm:$0xff]
  %v1373 = vld [vmem:[%s3 + $0x30] sm:$0xff]
  %v1374 = vld [vmem:[%s3 + $0x38] sm:$0xff]
  %v1375 = vld [vmem:[%s3 + $0x40] sm:$0xff]
  %v1376 = vld [vmem:[%s3 + $0x48] sm:$0xff]
  %v1377 = vld [vmem:[%s3 + $0x50] sm:$0xff]
  %v1378 = vld [vmem:[%s3 + $0x58] sm:$0xff]
  %v1379 = vld [vmem:[%s3 + $0x60] sm:$0xff]
  %v1380 = vld [vmem:[%s3 + $0x68] sm:$0xff]
  %v1381 = vld [vmem:[%s3 + $0x70] sm:$0xff]
  %v1382 = vld [vmem:[%s3 + $0x78] sm:$0xff]
  %v1383 = vld [vmem:[%s3 + $0x80] sm:$0xff]
  %v1384 = vld [vmem:[%s3 + $0x88] sm:$0xff]
  %v1385 = vld [vmem:[%s3 + $0x90] sm:$0xff]
  %v1386 = vld [vmem:[%s3 + $0x98] sm:$0xff]
  %v1387 = vld [vmem:[%s3 + $0xa0] sm:$0xff]
  %v1388 = vld [vmem:[%s3 + $0xa8] sm:$0xff]
  %v1389 = vld [vmem:[%s3 + $0xb0] sm:$0xff]
  %v1390 = vld [vmem:[%s3 + $0xb8] sm:$0xff]
  %v1391 = vld [vmem:[%s3 + $0xc0] sm:$0xff]
  %v1392 = vld [vmem:[%s3 + $0xc8] sm:$0xff]
  %v1393 = vld [vmem:[%s3 + $0xd0] sm:$0xff]
  %v1394 = vld [vmem:[%s3 + $0xd8] sm:$0xff]
  %v1395 = vld [vmem:[%s3 + $0xe0] sm:$0xff]
  %v1396 = vld [vmem:[%s3 + $0xe8] sm:$0xff]
  %v1397 = vld [vmem:[%s3 + $0xf0] sm:$0xff]
  %v1398 = vld [vmem:[%s3 + $0xf8] sm:$0xff]
  %v1399 = vld [vmem:[%s3 + $0x100] sm:$0xff]
  %v1400 = vld [vmem:[%s3 + $0x108] sm:$0xff]
  %v1401 = vld [vmem:[%s3 + $0x110] sm:$0xff]
  %v1402 = vld [vmem:[%s3 + $0x118] sm:$0xff]
  %v1403 = vld [vmem:[%s3 + $0x120] sm:$0xff]
  %v1404 = vld [vmem:[%s3 + $0x128] sm:$0xff]
  %v1405 = vld [vmem:[%s3 + $0x130] sm:$0xff]
  %v1406 = vld [vmem:[%s3 + $0x138] sm:$0xff]
  %v1407 = vld [vmem:[%s3 + $0x140] sm:$0xff]
  %v1408 = vld [vmem:[%s3 + $0x148] sm:$0xff]
  %v1409 = vld [vmem:[%s3 + $0x150] sm:$0xff]
  %v1410 = vld [vmem:[%s3 + $0x158] sm:$0xff]
  %v1411 = vld [vmem:[%s3 + $0x160] sm:$0xff]
  %v1412 = vld [vmem:[%s3 + $0x168] sm:$0xff]
  %v1413 = vld [vmem:[%s3 + $0x170] sm:$0xff]
  %v1414 = vld [vmem:[%s3 + $0x178] sm:$0xff]
  %v1415 = vld [vmem:[%s3 + $0x180] sm:$0xff]
  %v1416 = vld [vmem:[%s3 + $0x188] sm:$0xff]
  %v1417 = vld [vmem:[%s3 + $0x190] sm:$0xff]
  %v1418 = vld [vmem:[%s3 + $0x198] sm:$0xff]
  %v1419 = vld [vmem:[%s3 + $0x1a0] sm:$0xff]
  %v1420 = vld [vmem:[%s3 + $0x1a8] sm:$0xff]
  %v1421 = vld [vmem:[%s3 + $0x1b0] sm:$0xff]
  %v1422 = vld [vmem:[%s3 + $0x1b8] sm:$0xff]
  %v1423 = vld [vmem:[%s3 + $0x1c0] sm:$0xff]
  %v1424 = vld [vmem:[%s3 + $0x1c8] sm:$0xff]
  %v1425 = vld [vmem:[%s3 + $0x1d0] sm:$0xff]
  %v1426 = vld [vmem:[%s3 + $0x1d8] sm:$0xff]
  %v1427 = vld [vmem:[%s3 + $0x1e0] sm:$0xff]
  %v1428 = vld [vmem:[%s3 + $0x1e8] sm:$0xff]
  %v1429 = vld [vmem:[%s3 + $0x1f0] sm:$0xff]
  %v1430 = vld [vmem:[%s3 + $0x1f8] sm:$0xff]
  %1431 = vmatprep.subr.mxu0 %v1368
  %1432 = vmatpush1.msra.mxu0 %v1367
  %1433 = vmatprep.subr.mxu0 %v1372
  %1434 = vmatpush1.msra.mxu0 %v1371
  %1435 = vmatprep.subr.mxu0 %v1376
  %1436 = vmatpush1.msra.mxu0 %v1375
  %1437 = vmatprep.subr.mxu0 %v1380
  %1438 = vmatpush1.msra.mxu0 %v1379
  %1439 = vmatprep.subr.mxu0 %v1384
  %1440 = vmatpush1.msra.mxu0 %v1383
  %1441 = vmatprep.subr.mxu0 %v1388
  %1442 = vmatpush1.msra.mxu0 %v1387
  %1443 = vmatprep.subr.mxu0 %v1392
  %1444 = vmatpush1.msra.mxu0 %v1391
  %1445 = vmatprep.subr.mxu0 %v1396
  %1446 = vmatpush1.msra.mxu0 %v1395
  %1447 = vmatprep.subr.mxu0 %v1400
  %1448 = vmatpush1.msra.mxu0 %v1399
  %1449 = vmatprep.subr.mxu0 %v1404
  %1450 = vmatpush1.msra.mxu0 %v1403
  %1451 = vmatprep.subr.mxu0 %v1408
  %1452 = vmatpush1.msra.mxu0 %v1407
  %1453 = vmatprep.subr.mxu0 %v1412
  %1454 = vmatpush1.msra.mxu0 %v1411
  %1455 = vmatprep.subr.mxu0 %v1416
  %1456 = vmatpush1.msra.mxu0 %v1415
  %1457 = vmatprep.subr.mxu0 %v1420
  %1458 = vmatpush1.msra.mxu0 %v1419
  %1459 = vmatprep.subr.mxu0 %v1424
  %1460 = vmatpush1.msra.mxu0 %v1423
  %1461 = vmatprep.subr.mxu0 %v1428
  %1462 = vmatpush1.msra.mxu0 %v1427
  %1463 = vmatprep.subr.mxu0 0.0
  %1464 = vmatpush1.msra.mxu0 0.0
  %1465 = vmatprep.subr.mxu0 0.0
  %1466 = vmatpush1.msra.mxu0 0.0
  %1467 = vmatprep.subr.mxu0 0.0
  %1468 = vmatpush1.msra.mxu0 0.0
  %1469 = vmatprep.subr.mxu0 0.0
  %1470 = vmatpush1.msra.mxu0 0.0
  %1471 = vmatprep.subr.mxu0 0.0
  %1472 = vmatpush1.msra.mxu0 0.0
  %1473 = vmatprep.subr.mxu0 0.0
  %1474 = vmatpush1.msra.mxu0 0.0
  %1475 = vmatprep.subr.mxu0 0.0
  %1476 = vmatpush1.msra.mxu0 0.0
  %1477 = vmatprep.subr.mxu0 0.0
  %1478 = vmatpush1.msra.mxu0 0.0
  %1479 = vmatprep.subr.mxu0 0.0
  %1480 = vmatpush1.msra.mxu0 0.0
  %1481 = vmatprep.subr.mxu0 0.0
  %1482 = vmatpush1.msra.mxu0 0.0
  %1483 = vmatprep.subr.mxu0 0.0
  %1484 = vmatpush1.msra.mxu0 0.0
  %1485 = vmatprep.subr.mxu0 0.0
  %1486 = vmatpush1.msra.mxu0 0.0
  %1487 = vmatprep.subr.mxu0 0.0
  %1488 = vmatpush1.msra.mxu0 0.0
  %1489 = vmatprep.subr.mxu0 0.0
  %1490 = vmatpush1.msra.mxu0 0.0
  %1491 = vmatprep.subr.mxu0 0.0
  %1492 = vmatpush1.msra.mxu0 0.0
  %1493 = vmatprep.subr.mxu0 0.0
  %1494 = vmatpush1.msra.mxu0 0.0
  %1495 = vmatprep.mubr.f32.mxu0 0.0
  %1496 = vmatmul.mubr.f32.gmra.mrb[0].mxu0 %v1363
  %v1497 = vpop.f32.mrb[0].mxu0
  %v1498 = vadd.f32 0.0, %v1497
  %v1499 = vpop.f32.mrb[0].mxu0
  %v1500 = vadd.f32 0.0, %v1499
  %1501 = vdwg.mxu0
  %1502 = vmatprep.subr.mxu0 %v1370
  %1503 = vmatpush1.msra.mxu0 %v1369
  %1504 = vmatprep.subr.mxu0 %v1374
  %1505 = vmatpush1.msra.mxu0 %v1373
  %1506 = vmatprep.subr.mxu0 %v1378
  %1507 = vmatpush1.msra.mxu0 %v1377
  %1508 = vmatprep.subr.mxu0 %v1382
  %1509 = vmatpush1.msra.mxu0 %v1381
  %1510 = vmatprep.subr.mxu0 %v1386
  %1511 = vmatpush1.msra.mxu0 %v1385
  %1512 = vmatprep.subr.mxu0 %v1390
  %1513 = vmatpush1.msra.mxu0 %v1389
  %1514 = vmatprep.subr.mxu0 %v1394
  %1515 = vmatpush1.msra.mxu0 %v1393
  %1516 = vmatprep.subr.mxu0 %v1398
  %1517 = vmatpush1.msra.mxu0 %v1397
  %1518 = vmatprep.subr.mxu0 %v1402
  %1519 = vmatpush1.msra.mxu0 %v1401
  %1520 = vmatprep.subr.mxu0 %v1406
  %1521 = vmatpush1.msra.mxu0 %v1405
  %1522 = vmatprep.subr.mxu0 %v1410
  %1523 = vmatpush1.msra.mxu0 %v1409
  %1524 = vmatprep.subr.mxu0 %v1414
  %1525 = vmatpush1.msra.mxu0 %v1413
  %1526 = vmatprep.subr.mxu0 %v1418
  %1527 = vmatpush1.msra.mxu0 %v1417
  %1528 = vmatprep.subr.mxu0 %v1422
  %1529 = vmatpush1.msra.mxu0 %v1421
  %1530 = vmatprep.subr.mxu0 %v1426
  %1531 = vmatpush1.msra.mxu0 %v1425
  %1532 = vmatprep.subr.mxu0 %v1430
  %1533 = vmatpush1.msra.mxu0 %v1429
  %1534 = vmatprep.subr.mxu0 0.0
  %1535 = vmatpush1.msra.mxu0 0.0
  %1536 = vmatprep.subr.mxu0 0.0
  %1537 = vmatpush1.msra.mxu0 0.0
  %1538 = vmatprep.subr.mxu0 0.0
  %1539 = vmatpush1.msra.mxu0 0.0
  %1540 = vmatprep.subr.mxu0 0.0
  %1541 = vmatpush1.msra.mxu0 0.0
  %1542 = vmatprep.subr.mxu0 0.0
  %1543 = vmatpush1.msra.mxu0 0.0
  %1544 = vmatprep.subr.mxu0 0.0
  %1545 = vmatpush1.msra.mxu0 0.0
  %1546 = vmatprep.subr.mxu0 0.0
  %1547 = vmatpush1.msra.mxu0 0.0
  %1548 = vmatprep.subr.mxu0 0.0
  %1549 = vmatpush1.msra.mxu0 0.0
  %1550 = vmatprep.subr.mxu0 0.0
  %1551 = vmatpush1.msra.mxu0 0.0
  %1552 = vmatprep.subr.mxu0 0.0
  %1553 = vmatpush1.msra.mxu0 0.0
  %1554 = vmatprep.subr.mxu0 0.0
  %1555 = vmatpush1.msra.mxu0 0.0
  %1556 = vmatprep.subr.mxu0 0.0
  %1557 = vmatpush1.msra.mxu0 0.0
  %1558 = vmatprep.subr.mxu0 0.0
  %1559 = vmatpush1.msra.mxu0 0.0
  %1560 = vmatprep.subr.mxu0 0.0
  %1561 = vmatpush1.msra.mxu0 0.0
  %1562 = vmatprep.subr.mxu0 0.0
  %1563 = vmatpush1.msra.mxu0 0.0
  %1564 = vmatprep.subr.mxu0 0.0
  %1565 = vmatpush1.msra.mxu0 0.0
  %1566 = vmatprep.mubr.f32.mxu0 0.0
  %1567 = vmatmul.mubr.f32.gmra.mrb[0].mxu0 %v1363
  %v1568 = vpop.f32.mrb[0].mxu0
  %v1569 = vadd.f32 0.0, %v1568
  %v1570 = vpop.f32.mrb[0].mxu0
  %v1571 = vadd.f32 0.0, %v1570
  %1572 = vdwg.mxu0
  %v1577 = vcombine.low %v1498, %v1500
  %v1578 = vcombine.low %v1569, %v1571
  %v1580 = vunpack.c.l.s4 1983009808
  %v1581 = vunpack.c.0.s8 %v1580
  %v1582 = vlaneseq
  %v1583 = vshrl.u32 %v1582, 7
  %v1584 = vsub.s32 %v1581, %v1583
  %v1585 = vrot.slane %v1577, %v1584
  %v1587 = vunpack.c.l.s4 1983009808
  %v1588 = vunpack.c.0.s8 %v1587
  %v1589 = vlaneseq
  %v1590 = vshrl.u32 %v1589, 7
  %v1591 = vsub.s32 %v1588, %v1590
  %v1592 = vrot.slane %v1578, %v1591
  %v1593 = vcombine.low %v1585, %v1592
  %v1595 = vadd.f32 %v1366, %v1593
  %v1596 = vxor.u32 %v1595, 2147483648
  %v1597 = vmul.f32 %v1596, 1.442695
  %v1598 = vpow.pop %v1597
  %v1599 = vadd.f32 %v1598, 1.0
  %v1600 = vrcp.pop %v1599
  %v1601 = vmul.f32 1.0, %v1600
  %v1603 = vrot.slane %v1595, 2
  %v1605 = vxor.u32 %v1603, 2147483648
  %v1606 = vmul.f32 %v1605, 1.442695
  %v1607 = vpow.pop %v1606
  %v1608 = vadd.f32 %v1607, 1.0
  %v1609 = vrcp.pop %v1608
  %v1610 = vmul.f32 1.0, %v1609
  %v1611 = vrot.slane %v1595, 4
  %v1613 = vtanh.pop %v1611
  %v1614 = vrot.slane %v1595, 6
  %v1616 = vxor.u32 %v1614, 2147483648
  %v1617 = vmul.f32 %v1616, 1.442695
  %v1618 = vpow.pop %v1617
  %v1619 = vadd.f32 %v1618, 1.0
  %v1620 = vrcp.pop %v1619
  %v1621 = vmul.f32 1.0, %v1620
  %v1622 = vmul.f32 %v1610, %v1364
  %v1623 = vmul.f32 %v1601, %v1613
  %v1624 = vadd.f32 %v1622, %v1623
  %v1625 = vtanh.pop %v1624
  %v1626 = vmul.f32 %v1621, %v1625
  %1627 = vst [vmem:[#allocation2] sm:$0x3] %v1626
  %1628 = vst [vmem:[#allocation3] sm:$0x3] %v1624
  %s1629 = scalar_lea.vmem %s4, 10
  %1630 = vst [vmem:[%s1629] sm:$0x3] %v1626
  %v1631 = vld [vmem:[#allocation2] sm:$0x3]
  %v1632 = vld [vmem:[#allocation3] sm:$0x3]
  %s1633 = scalar_lea.vmem %s0, 48
  %v1634 = vld [vmem:[%s1633] sm:$0xff]
  %v1635 = vld [vmem:[%s3] sm:$0xff]
  %v1636 = vld [vmem:[%s3 + $0x8] sm:$0xff]
  %v1637 = vld [vmem:[%s3 + $0x10] sm:$0xff]
  %v1638 = vld [vmem:[%s3 + $0x18] sm:$0xff]
  %v1639 = vld [vmem:[%s3 + $0x20] sm:$0xff]
  %v1640 = vld [vmem:[%s3 + $0x28] sm:$0xff]
  %v1641 = vld [vmem:[%s3 + $0x30] sm:$0xff]
  %v1642 = vld [vmem:[%s3 + $0x38] sm:$0xff]
  %v1643 = vld [vmem:[%s3 + $0x40] sm:$0xff]
  %v1644 = vld [vmem:[%s3 + $0x48] sm:$0xff]
  %v1645 = vld [vmem:[%s3 + $0x50] sm:$0xff]
  %v1646 = vld [vmem:[%s3 + $0x58] sm:$0xff]
  %v1647 = vld [vmem:[%s3 + $0x60] sm:$0xff]
  %v1648 = vld [vmem:[%s3 + $0x68] sm:$0xff]
  %v1649 = vld [vmem:[%s3 + $0x70] sm:$0xff]
  %v1650 = vld [vmem:[%s3 + $0x78] sm:$0xff]
  %v1651 = vld [vmem:[%s3 + $0x80] sm:$0xff]
  %v1652 = vld [vmem:[%s3 + $0x88] sm:$0xff]
  %v1653 = vld [vmem:[%s3 + $0x90] sm:$0xff]
  %v1654 = vld [vmem:[%s3 + $0x98] sm:$0xff]
  %v1655 = vld [vmem:[%s3 + $0xa0] sm:$0xff]
  %v1656 = vld [vmem:[%s3 + $0xa8] sm:$0xff]
  %v1657 = vld [vmem:[%s3 + $0xb0] sm:$0xff]
  %v1658 = vld [vmem:[%s3 + $0xb8] sm:$0xff]
  %v1659 = vld [vmem:[%s3 + $0xc0] sm:$0xff]
  %v1660 = vld [vmem:[%s3 + $0xc8] sm:$0xff]
  %v1661 = vld [vmem:[%s3 + $0xd0] sm:$0xff]
  %v1662 = vld [vmem:[%s3 + $0xd8] sm:$0xff]
  %v1663 = vld [vmem:[%s3 + $0xe0] sm:$0xff]
  %v1664 = vld [vmem:[%s3 + $0xe8] sm:$0xff]
  %v1665 = vld [vmem:[%s3 + $0xf0] sm:$0xff]
  %v1666 = vld [vmem:[%s3 + $0xf8] sm:$0xff]
  %v1667 = vld [vmem:[%s3 + $0x100] sm:$0xff]
  %v1668 = vld [vmem:[%s3 + $0x108] sm:$0xff]
  %v1669 = vld [vmem:[%s3 + $0x110] sm:$0xff]
  %v1670 = vld [vmem:[%s3 + $0x118] sm:$0xff]
  %v1671 = vld [vmem:[%s3 + $0x120] sm:$0xff]
  %v1672 = vld [vmem:[%s3 + $0x128] sm:$0xff]
  %v1673 = vld [vmem:[%s3 + $0x130] sm:$0xff]
  %v1674 = vld [vmem:[%s3 + $0x138] sm:$0xff]
  %v1675 = vld [vmem:[%s3 + $0x140] sm:$0xff]
  %v1676 = vld [vmem:[%s3 + $0x148] sm:$0xff]
  %v1677 = vld [vmem:[%s3 + $0x150] sm:$0xff]
  %v1678 = vld [vmem:[%s3 + $0x158] sm:$0xff]
  %v1679 = vld [vmem:[%s3 + $0x160] sm:$0xff]
  %v1680 = vld [vmem:[%s3 + $0x168] sm:$0xff]
  %v1681 = vld [vmem:[%s3 + $0x170] sm:$0xff]
  %v1682 = vld [vmem:[%s3 + $0x178] sm:$0xff]
  %v1683 = vld [vmem:[%s3 + $0x180] sm:$0xff]
  %v1684 = vld [vmem:[%s3 + $0x188] sm:$0xff]
  %v1685 = vld [vmem:[%s3 + $0x190] sm:$0xff]
  %v1686 = vld [vmem:[%s3 + $0x198] sm:$0xff]
  %v1687 = vld [vmem:[%s3 + $0x1a0] sm:$0xff]
  %v1688 = vld [vmem:[%s3 + $0x1a8] sm:$0xff]
  %v1689 = vld [vmem:[%s3 + $0x1b0] sm:$0xff]
  %v1690 = vld [vmem:[%s3 + $0x1b8] sm:$0xff]
  %v1691 = vld [vmem:[%s3 + $0x1c0] sm:$0xff]
  %v1692 = vld [vmem:[%s3 + $0x1c8] sm:$0xff]
  %v1693 = vld [vmem:[%s3 + $0x1d0] sm:$0xff]
  %v1694 = vld [vmem:[%s3 + $0x1d8] sm:$0xff]
  %v1695 = vld [vmem:[%s3 + $0x1e0] sm:$0xff]
  %v1696 = vld [vmem:[%s3 + $0x1e8] sm:$0xff]
  %v1697 = vld [vmem:[%s3 + $0x1f0] sm:$0xff]
  %v1698 = vld [vmem:[%s3 + $0x1f8] sm:$0xff]
  %1699 = vmatprep.subr.mxu0 %v1636
  %1700 = vmatpush1.msra.mxu0 %v1635
  %1701 = vmatprep.subr.mxu0 %v1640
  %1702 = vmatpush1.msra.mxu0 %v1639
  %1703 = vmatprep.subr.mxu0 %v1644
  %1704 = vmatpush1.msra.mxu0 %v1643
  %1705 = vmatprep.subr.mxu0 %v1648
  %1706 = vmatpush1.msra.mxu0 %v1647
  %1707 = vmatprep.subr.mxu0 %v1652
  %1708 = vmatpush1.msra.mxu0 %v1651
  %1709 = vmatprep.subr.mxu0 %v1656
  %1710 = vmatpush1.msra.mxu0 %v1655
  %1711 = vmatprep.subr.mxu0 %v1660
  %1712 = vmatpush1.msra.mxu0 %v1659
  %1713 = vmatprep.subr.mxu0 %v1664
  %1714 = vmatpush1.msra.mxu0 %v1663
  %1715 = vmatprep.subr.mxu0 %v1668
  %1716 = vmatpush1.msra.mxu0 %v1667
  %1717 = vmatprep.subr.mxu0 %v1672
  %1718 = vmatpush1.msra.mxu0 %v1671
  %1719 = vmatprep.subr.mxu0 %v1676
  %1720 = vmatpush1.msra.mxu0 %v1675
  %1721 = vmatprep.subr.mxu0 %v1680
  %1722 = vmatpush1.msra.mxu0 %v1679
  %1723 = vmatprep.subr.mxu0 %v1684
  %1724 = vmatpush1.msra.mxu0 %v1683
  %1725 = vmatprep.subr.mxu0 %v1688
  %1726 = vmatpush1.msra.mxu0 %v1687
  %1727 = vmatprep.subr.mxu0 %v1692
  %1728 = vmatpush1.msra.mxu0 %v1691
  %1729 = vmatprep.subr.mxu0 %v1696
  %1730 = vmatpush1.msra.mxu0 %v1695
  %1731 = vmatprep.subr.mxu0 0.0
  %1732 = vmatpush1.msra.mxu0 0.0
  %1733 = vmatprep.subr.mxu0 0.0
  %1734 = vmatpush1.msra.mxu0 0.0
  %1735 = vmatprep.subr.mxu0 0.0
  %1736 = vmatpush1.msra.mxu0 0.0
  %1737 = vmatprep.subr.mxu0 0.0
  %1738 = vmatpush1.msra.mxu0 0.0
  %1739 = vmatprep.subr.mxu0 0.0
  %1740 = vmatpush1.msra.mxu0 0.0
  %1741 = vmatprep.subr.mxu0 0.0
  %1742 = vmatpush1.msra.mxu0 0.0
  %1743 = vmatprep.subr.mxu0 0.0
  %1744 = vmatpush1.msra.mxu0 0.0
  %1745 = vmatprep.subr.mxu0 0.0
  %1746 = vmatpush1.msra.mxu0 0.0
  %1747 = vmatprep.subr.mxu0 0.0
  %1748 = vmatpush1.msra.mxu0 0.0
  %1749 = vmatprep.subr.mxu0 0.0
  %1750 = vmatpush1.msra.mxu0 0.0
  %1751 = vmatprep.subr.mxu0 0.0
  %1752 = vmatpush1.msra.mxu0 0.0
  %1753 = vmatprep.subr.mxu0 0.0
  %1754 = vmatpush1.msra.mxu0 0.0
  %1755 = vmatprep.subr.mxu0 0.0
  %1756 = vmatpush1.msra.mxu0 0.0
  %1757 = vmatprep.subr.mxu0 0.0
  %1758 = vmatpush1.msra.mxu0 0.0
  %1759 = vmatprep.subr.mxu0 0.0
  %1760 = vmatpush1.msra.mxu0 0.0
  %1761 = vmatprep.subr.mxu0 0.0
  %1762 = vmatpush1.msra.mxu0 0.0
  %1763 = vmatprep.mubr.f32.mxu0 0.0
  %1764 = vmatmul.mubr.f32.gmra.mrb[0].mxu0 %v1631
  %v1765 = vpop.f32.mrb[0].mxu0
  %v1766 = vadd.f32 0.0, %v1765
  %v1767 = vpop.f32.mrb[0].mxu0
  %v1768 = vadd.f32 0.0, %v1767
  %1769 = vdwg.mxu0
  %1770 = vmatprep.subr.mxu0 %v1638
  %1771 = vmatpush1.msra.mxu0 %v1637
  %1772 = vmatprep.subr.mxu0 %v1642
  %1773 = vmatpush1.msra.mxu0 %v1641
  %1774 = vmatprep.subr.mxu0 %v1646
  %1775 = vmatpush1.msra.mxu0 %v1645
  %1776 = vmatprep.subr.mxu0 %v1650
  %1777 = vmatpush1.msra.mxu0 %v1649
  %1778 = vmatprep.subr.mxu0 %v1654
  %1779 = vmatpush1.msra.mxu0 %v1653
  %1780 = vmatprep.subr.mxu0 %v1658
  %1781 = vmatpush1.msra.mxu0 %v1657
  %1782 = vmatprep.subr.mxu0 %v1662
  %1783 = vmatpush1.msra.mxu0 %v1661
  %1784 = vmatprep.subr.mxu0 %v1666
  %1785 = vmatpush1.msra.mxu0 %v1665
  %1786 = vmatprep.subr.mxu0 %v1670
  %1787 = vmatpush1.msra.mxu0 %v1669
  %1788 = vmatprep.subr.mxu0 %v1674
  %1789 = vmatpush1.msra.mxu0 %v1673
  %1790 = vmatprep.subr.mxu0 %v1678
  %1791 = vmatpush1.msra.mxu0 %v1677
  %1792 = vmatprep.subr.mxu0 %v1682
  %1793 = vmatpush1.msra.mxu0 %v1681
  %1794 = vmatprep.subr.mxu0 %v1686
  %1795 = vmatpush1.msra.mxu0 %v1685
  %1796 = vmatprep.subr.mxu0 %v1690
  %1797 = vmatpush1.msra.mxu0 %v1689
  %1798 = vmatprep.subr.mxu0 %v1694
  %1799 = vmatpush1.msra.mxu0 %v1693
  %1800 = vmatprep.subr.mxu0 %v1698
  %1801 = vmatpush1.msra.mxu0 %v1697
  %1802 = vmatprep.subr.mxu0 0.0
  %1803 = vmatpush1.msra.mxu0 0.0
  %1804 = vmatprep.subr.mxu0 0.0
  %1805 = vmatpush1.msra.mxu0 0.0
  %1806 = vmatprep.subr.mxu0 0.0
  %1807 = vmatpush1.msra.mxu0 0.0
  %1808 = vmatprep.subr.mxu0 0.0
  %1809 = vmatpush1.msra.mxu0 0.0
  %1810 = vmatprep.subr.mxu0 0.0
  %1811 = vmatpush1.msra.mxu0 0.0
  %1812 = vmatprep.subr.mxu0 0.0
  %1813 = vmatpush1.msra.mxu0 0.0
  %1814 = vmatprep.subr.mxu0 0.0
  %1815 = vmatpush1.msra.mxu0 0.0
  %1816 = vmatprep.subr.mxu0 0.0
  %1817 = vmatpush1.msra.mxu0 0.0
  %1818 = vmatprep.subr.mxu0 0.0
  %1819 = vmatpush1.msra.mxu0 0.0
  %1820 = vmatprep.subr.mxu0 0.0
  %1821 = vmatpush1.msra.mxu0 0.0
  %1822 = vmatprep.subr.mxu0 0.0
  %1823 = vmatpush1.msra.mxu0 0.0
  %1824 = vmatprep.subr.mxu0 0.0
  %1825 = vmatpush1.msra.mxu0 0.0
  %1826 = vmatprep.subr.mxu0 0.0
  %1827 = vmatpush1.msra.mxu0 0.0
  %1828 = vmatprep.subr.mxu0 0.0
  %1829 = vmatpush1.msra.mxu0 0.0
  %1830 = vmatprep.subr.mxu0 0.0
  %1831 = vmatpush1.msra.mxu0 0.0
  %1832 = vmatprep.subr.mxu0 0.0
  %1833 = vmatpush1.msra.mxu0 0.0
  %1834 = vmatprep.mubr.f32.mxu0 0.0
  %1835 = vmatmul.mubr.f32.gmra.mrb[0].mxu0 %v1631
  %v1836 = vpop.f32.mrb[0].mxu0
  %v1837 = vadd.f32 0.0, %v1836
  %v1838 = vpop.f32.mrb[0].mxu0
  %v1839 = vadd.f32 0.0, %v1838
  %1840 = vdwg.mxu0
  %v1845 = vcombine.low %v1766, %v1768
  %v1846 = vcombine.low %v1837, %v1839
  %v1848 = vunpack.c.l.s4 1983009808
  %v1849 = vunpack.c.0.s8 %v1848
  %v1850 = vlaneseq
  %v1851 = vshrl.u32 %v1850, 7
  %v1852 = vsub.s32 %v1849, %v1851
  %v1853 = vrot.slane %v1845, %v1852
  %v1855 = vunpack.c.l.s4 1983009808
  %v1856 = vunpack.c.0.s8 %v1855
  %v1857 = vlaneseq
  %v1858 = vshrl.u32 %v1857, 7
  %v1859 = vsub.s32 %v1856, %v1858
  %v1860 = vrot.slane %v1846, %v1859
  %v1861 = vcombine.low %v1853, %v1860
  %v1863 = vadd.f32 %v1634, %v1861
  %v1864 = vxor.u32 %v1863, 2147483648
  %v1865 = vmul.f32 %v1864, 1.442695
  %v1866 = vpow.pop %v1865
  %v1867 = vadd.f32 %v1866, 1.0
  %v1868 = vrcp.pop %v1867
  %v1869 = vmul.f32 1.0, %v1868
  %v1871 = vrot.slane %v1863, 2
  %v1873 = vxor.u32 %v1871, 2147483648
  %v1874 = vmul.f32 %v1873, 1.442695
  %v1875 = vpow.pop %v1874
  %v1876 = vadd.f32 %v1875, 1.0
  %v1877 = vrcp.pop %v1876
  %v1878 = vmul.f32 1.0, %v1877
  %v1879 = vrot.slane %v1863, 4
  %v1881 = vtanh.pop %v1879
  %v1882 = vrot.slane %v1863, 6
  %v1884 = vxor.u32 %v1882, 2147483648
  %v1885 = vmul.f32 %v1884, 1.442695
  %v1886 = vpow.pop %v1885
  %v1887 = vadd.f32 %v1886, 1.0
  %v1888 = vrcp.pop %v1887
  %v1889 = vmul.f32 1.0, %v1888
  %v1890 = vmul.f32 %v1878, %v1632
  %v1891 = vmul.f32 %v1869, %v1881
  %v1892 = vadd.f32 %v1890, %v1891
  %v1893 = vtanh.pop %v1892
  %v1894 = vmul.f32 %v1889, %v1893
  %1895 = vst [vmem:[#allocation2] sm:$0x3] %v1894
  %1896 = vst [vmem:[#allocation3] sm:$0x3] %v1892
  %s1897 = scalar_lea.vmem %s4, 12
  %1898 = vst [vmem:[%s1897] sm:$0x3] %v1894
  %v1899 = vld [vmem:[#allocation2] sm:$0x3]
  %v1900 = vld [vmem:[#allocation3] sm:$0x3]
  %s1901 = scalar_lea.vmem %s0, 56
  %v1902 = vld [vmem:[%s1901] sm:$0xff]
  %v1903 = vld [vmem:[%s3] sm:$0xff]
  %v1904 = vld [vmem:[%s3 + $0x8] sm:$0xff]
  %v1905 = vld [vmem:[%s3 + $0x10] sm:$0xff]
  %v1906 = vld [vmem:[%s3 + $0x18] sm:$0xff]
  %v1907 = vld [vmem:[%s3 + $0x20] sm:$0xff]
  %v1908 = vld [vmem:[%s3 + $0x28] sm:$0xff]
  %v1909 = vld [vmem:[%s3 + $0x30] sm:$0xff]
  %v1910 = vld [vmem:[%s3 + $0x38] sm:$0xff]
  %v1911 = vld [vmem:[%s3 + $0x40] sm:$0xff]
  %v1912 = vld [vmem:[%s3 + $0x48] sm:$0xff]
  %v1913 = vld [vmem:[%s3 + $0x50] sm:$0xff]
  %v1914 = vld [vmem:[%s3 + $0x58] sm:$0xff]
  %v1915 = vld [vmem:[%s3 + $0x60] sm:$0xff]
  %v1916 = vld [vmem:[%s3 + $0x68] sm:$0xff]
  %v1917 = vld [vmem:[%s3 + $0x70] sm:$0xff]
  %v1918 = vld [vmem:[%s3 + $0x78] sm:$0xff]
  %v1919 = vld [vmem:[%s3 + $0x80] sm:$0xff]
  %v1920 = vld [vmem:[%s3 + $0x88] sm:$0xff]
  %v1921 = vld [vmem:[%s3 + $0x90] sm:$0xff]
  %v1922 = vld [vmem:[%s3 + $0x98] sm:$0xff]
  %v1923 = vld [vmem:[%s3 + $0xa0] sm:$0xff]
  %v1924 = vld [vmem:[%s3 + $0xa8] sm:$0xff]
  %v1925 = vld [vmem:[%s3 + $0xb0] sm:$0xff]
  %v1926 = vld [vmem:[%s3 + $0xb8] sm:$0xff]
  %v1927 = vld [vmem:[%s3 + $0xc0] sm:$0xff]
  %v1928 = vld [vmem:[%s3 + $0xc8] sm:$0xff]
  %v1929 = vld [vmem:[%s3 + $0xd0] sm:$0xff]
  %v1930 = vld [vmem:[%s3 + $0xd8] sm:$0xff]
  %v1931 = vld [vmem:[%s3 + $0xe0] sm:$0xff]
  %v1932 = vld [vmem:[%s3 + $0xe8] sm:$0xff]
  %v1933 = vld [vmem:[%s3 + $0xf0] sm:$0xff]
  %v1934 = vld [vmem:[%s3 + $0xf8] sm:$0xff]
  %v1935 = vld [vmem:[%s3 + $0x100] sm:$0xff]
  %v1936 = vld [vmem:[%s3 + $0x108] sm:$0xff]
  %v1937 = vld [vmem:[%s3 + $0x110] sm:$0xff]
  %v1938 = vld [vmem:[%s3 + $0x118] sm:$0xff]
  %v1939 = vld [vmem:[%s3 + $0x120] sm:$0xff]
  %v1940 = vld [vmem:[%s3 + $0x128] sm:$0xff]
  %v1941 = vld [vmem:[%s3 + $0x130] sm:$0xff]
  %v1942 = vld [vmem:[%s3 + $0x138] sm:$0xff]
  %v1943 = vld [vmem:[%s3 + $0x140] sm:$0xff]
  %v1944 = vld [vmem:[%s3 + $0x148] sm:$0xff]
  %v1945 = vld [vmem:[%s3 + $0x150] sm:$0xff]
  %v1946 = vld [vmem:[%s3 + $0x158] sm:$0xff]
  %v1947 = vld [vmem:[%s3 + $0x160] sm:$0xff]
  %v1948 = vld [vmem:[%s3 + $0x168] sm:$0xff]
  %v1949 = vld [vmem:[%s3 + $0x170] sm:$0xff]
  %v1950 = vld [vmem:[%s3 + $0x178] sm:$0xff]
  %v1951 = vld [vmem:[%s3 + $0x180] sm:$0xff]
  %v1952 = vld [vmem:[%s3 + $0x188] sm:$0xff]
  %v1953 = vld [vmem:[%s3 + $0x190] sm:$0xff]
  %v1954 = vld [vmem:[%s3 + $0x198] sm:$0xff]
  %v1955 = vld [vmem:[%s3 + $0x1a0] sm:$0xff]
  %v1956 = vld [vmem:[%s3 + $0x1a8] sm:$0xff]
  %v1957 = vld [vmem:[%s3 + $0x1b0] sm:$0xff]
  %v1958 = vld [vmem:[%s3 + $0x1b8] sm:$0xff]
  %v1959 = vld [vmem:[%s3 + $0x1c0] sm:$0xff]
  %v1960 = vld [vmem:[%s3 + $0x1c8] sm:$0xff]
  %v1961 = vld [vmem:[%s3 + $0x1d0] sm:$0xff]
  %v1962 = vld [vmem:[%s3 + $0x1d8] sm:$0xff]
  %v1963 = vld [vmem:[%s3 + $0x1e0] sm:$0xff]
  %v1964 = vld [vmem:[%s3 + $0x1e8] sm:$0xff]
  %v1965 = vld [vmem:[%s3 + $0x1f0] sm:$0xff]
  %v1966 = vld [vmem:[%s3 + $0x1f8] sm:$0xff]
  %1967 = vmatprep.subr.mxu0 %v1904
  %1968 = vmatpush1.msra.mxu0 %v1903
  %1969 = vmatprep.subr.mxu0 %v1908
  %1970 = vmatpush1.msra.mxu0 %v1907
  %1971 = vmatprep.subr.mxu0 %v1912
  %1972 = vmatpush1.msra.mxu0 %v1911
  %1973 = vmatprep.subr.mxu0 %v1916
  %1974 = vmatpush1.msra.mxu0 %v1915
  %1975 = vmatprep.subr.mxu0 %v1920
  %1976 = vmatpush1.msra.mxu0 %v1919
  %1977 = vmatprep.subr.mxu0 %v1924
  %1978 = vmatpush1.msra.mxu0 %v1923
  %1979 = vmatprep.subr.mxu0 %v1928
  %1980 = vmatpush1.msra.mxu0 %v1927
  %1981 = vmatprep.subr.mxu0 %v1932
  %1982 = vmatpush1.msra.mxu0 %v1931
  %1983 = vmatprep.subr.mxu0 %v1936
  %1984 = vmatpush1.msra.mxu0 %v1935
  %1985 = vmatprep.subr.mxu0 %v1940
  %1986 = vmatpush1.msra.mxu0 %v1939
  %1987 = vmatprep.subr.mxu0 %v1944
  %1988 = vmatpush1.msra.mxu0 %v1943
  %1989 = vmatprep.subr.mxu0 %v1948
  %1990 = vmatpush1.msra.mxu0 %v1947
  %1991 = vmatprep.subr.mxu0 %v1952
  %1992 = vmatpush1.msra.mxu0 %v1951
  %1993 = vmatprep.subr.mxu0 %v1956
  %1994 = vmatpush1.msra.mxu0 %v1955
  %1995 = vmatprep.subr.mxu0 %v1960
  %1996 = vmatpush1.msra.mxu0 %v1959
  %1997 = vmatprep.subr.mxu0 %v1964
  %1998 = vmatpush1.msra.mxu0 %v1963
  %1999 = vmatprep.subr.mxu0 0.0
  %2000 = vmatpush1.msra.mxu0 0.0
  %2001 = vmatprep.subr.mxu0 0.0
  %2002 = vmatpush1.msra.mxu0 0.0
  %2003 = vmatprep.subr.mxu0 0.0
  %2004 = vmatpush1.msra.mxu0 0.0
  %2005 = vmatprep.subr.mxu0 0.0
  %2006 = vmatpush1.msra.mxu0 0.0
  %2007 = vmatprep.subr.mxu0 0.0
  %2008 = vmatpush1.msra.mxu0 0.0
  %2009 = vmatprep.subr.mxu0 0.0
  %2010 = vmatpush1.msra.mxu0 0.0
  %2011 = vmatprep.subr.mxu0 0.0
  %2012 = vmatpush1.msra.mxu0 0.0
  %2013 = vmatprep.subr.mxu0 0.0
  %2014 = vmatpush1.msra.mxu0 0.0
  %2015 = vmatprep.subr.mxu0 0.0
  %2016 = vmatpush1.msra.mxu0 0.0
  %2017 = vmatprep.subr.mxu0 0.0
  %2018 = vmatpush1.msra.mxu0 0.0
  %2019 = vmatprep.subr.mxu0 0.0
  %2020 = vmatpush1.msra.mxu0 0.0
  %2021 = vmatprep.subr.mxu0 0.0
  %2022 = vmatpush1.msra.mxu0 0.0
  %2023 = vmatprep.subr.mxu0 0.0
  %2024 = vmatpush1.msra.mxu0 0.0
  %2025 = vmatprep.subr.mxu0 0.0
  %2026 = vmatpush1.msra.mxu0 0.0
  %2027 = vmatprep.subr.mxu0 0.0
  %2028 = vmatpush1.msra.mxu0 0.0
  %2029 = vmatprep.subr.mxu0 0.0
  %2030 = vmatpush1.msra.mxu0 0.0
  %2031 = vmatprep.mubr.f32.mxu0 0.0
  %2032 = vmatmul.mubr.f32.gmra.mrb[0].mxu0 %v1899
  %v2033 = vpop.f32.mrb[0].mxu0
  %v2034 = vadd.f32 0.0, %v2033
  %v2035 = vpop.f32.mrb[0].mxu0
  %v2036 = vadd.f32 0.0, %v2035
  %2037 = vdwg.mxu0
  %2038 = vmatprep.subr.mxu0 %v1906
  %2039 = vmatpush1.msra.mxu0 %v1905
  %2040 = vmatprep.subr.mxu0 %v1910
  %2041 = vmatpush1.msra.mxu0 %v1909
  %2042 = vmatprep.subr.mxu0 %v1914
  %2043 = vmatpush1.msra.mxu0 %v1913
  %2044 = vmatprep.subr.mxu0 %v1918
  %2045 = vmatpush1.msra.mxu0 %v1917
  %2046 = vmatprep.subr.mxu0 %v1922
  %2047 = vmatpush1.msra.mxu0 %v1921
  %2048 = vmatprep.subr.mxu0 %v1926
  %2049 = vmatpush1.msra.mxu0 %v1925
  %2050 = vmatprep.subr.mxu0 %v1930
  %2051 = vmatpush1.msra.mxu0 %v1929
  %2052 = vmatprep.subr.mxu0 %v1934
  %2053 = vmatpush1.msra.mxu0 %v1933
  %2054 = vmatprep.subr.mxu0 %v1938
  %2055 = vmatpush1.msra.mxu0 %v1937
  %2056 = vmatprep.subr.mxu0 %v1942
  %2057 = vmatpush1.msra.mxu0 %v1941
  %2058 = vmatprep.subr.mxu0 %v1946
  %2059 = vmatpush1.msra.mxu0 %v1945
  %2060 = vmatprep.subr.mxu0 %v1950
  %2061 = vmatpush1.msra.mxu0 %v1949
  %2062 = vmatprep.subr.mxu0 %v1954
  %2063 = vmatpush1.msra.mxu0 %v1953
  %2064 = vmatprep.subr.mxu0 %v1958
  %2065 = vmatpush1.msra.mxu0 %v1957
  %2066 = vmatprep.subr.mxu0 %v1962
  %2067 = vmatpush1.msra.mxu0 %v1961
  %2068 = vmatprep.subr.mxu0 %v1966
  %2069 = vmatpush1.msra.mxu0 %v1965
  %2070 = vmatprep.subr.mxu0 0.0
  %2071 = vmatpush1.msra.mxu0 0.0
  %2072 = vmatprep.subr.mxu0 0.0
  %2073 = vmatpush1.msra.mxu0 0.0
  %2074 = vmatprep.subr.mxu0 0.0
  %2075 = vmatpush1.msra.mxu0 0.0
  %2076 = vmatprep.subr.mxu0 0.0
  %2077 = vmatpush1.msra.mxu0 0.0
  %2078 = vmatprep.subr.mxu0 0.0
  %2079 = vmatpush1.msra.mxu0 0.0
  %2080 = vmatprep.subr.mxu0 0.0
  %2081 = vmatpush1.msra.mxu0 0.0
  %2082 = vmatprep.subr.mxu0 0.0
  %2083 = vmatpush1.msra.mxu0 0.0
  %2084 = vmatprep.subr.mxu0 0.0
  %2085 = vmatpush1.msra.mxu0 0.0
  %2086 = vmatprep.subr.mxu0 0.0
  %2087 = vmatpush1.msra.mxu0 0.0
  %2088 = vmatprep.subr.mxu0 0.0
  %2089 = vmatpush1.msra.mxu0 0.0
  %2090 = vmatprep.subr.mxu0 0.0
  %2091 = vmatpush1.msra.mxu0 0.0
  %2092 = vmatprep.subr.mxu0 0.0
  %2093 = vmatpush1.msra.mxu0 0.0
  %2094 = vmatprep.subr.mxu0 0.0
  %2095 = vmatpush1.msra.mxu0 0.0
  %2096 = vmatprep.subr.mxu0 0.0
  %2097 = vmatpush1.msra.mxu0 0.0
  %2098 = vmatprep.subr.mxu0 0.0
  %2099 = vmatpush1.msra.mxu0 0.0
  %2100 = vmatprep.subr.mxu0 0.0
  %2101 = vmatpush1.msra.mxu0 0.0
  %2102 = vmatprep.mubr.f32.mxu0 0.0
  %2103 = vmatmul.mubr.f32.gmra.mrb[0].mxu0 %v1899
  %v2104 = vpop.f32.mrb[0].mxu0
  %v2105 = vadd.f32 0.0, %v2104
  %v2106 = vpop.f32.mrb[0].mxu0
  %v2107 = vadd.f32 0.0, %v2106
  %2108 = vdwg.mxu0
  %v2113 = vcombine.low %v2034, %v2036
  %v2114 = vcombine.low %v2105, %v2107
  %v2116 = vunpack.c.l.s4 1983009808
  %v2117 = vunpack.c.0.s8 %v2116
  %v2118 = vlaneseq
  %v2119 = vshrl.u32 %v2118, 7
  %v2120 = vsub.s32 %v2117, %v2119
  %v2121 = vrot.slane %v2113, %v2120
  %v2123 = vunpack.c.l.s4 1983009808
  %v2124 = vunpack.c.0.s8 %v2123
  %v2125 = vlaneseq
  %v2126 = vshrl.u32 %v2125, 7
  %v2127 = vsub.s32 %v2124, %v2126
  %v2128 = vrot.slane %v2114, %v2127
  %v2129 = vcombine.low %v2121, %v2128
  %v2131 = vadd.f32 %v1902, %v2129
  %v2132 = vxor.u32 %v2131, 2147483648
  %v2133 = vmul.f32 %v2132, 1.442695
  %v2134 = vpow.pop %v2133
  %v2135 = vadd.f32 %v2134, 1.0
  %v2136 = vrcp.pop %v2135
  %v2137 = vmul.f32 1.0, %v2136
  %v2139 = vrot.slane %v2131, 2
  %v2141 = vxor.u32 %v2139, 2147483648
  %v2142 = vmul.f32 %v2141, 1.442695
  %v2143 = vpow.pop %v2142
  %v2144 = vadd.f32 %v2143, 1.0
  %v2145 = vrcp.pop %v2144
  %v2146 = vmul.f32 1.0, %v2145
  %v2147 = vrot.slane %v2131, 4
  %v2149 = vtanh.pop %v2147
  %v2150 = vrot.slane %v2131, 6
  %v2152 = vxor.u32 %v2150, 2147483648
  %v2153 = vmul.f32 %v2152, 1.442695
  %v2154 = vpow.pop %v2153
  %v2155 = vadd.f32 %v2154, 1.0
  %v2156 = vrcp.pop %v2155
  %v2157 = vmul.f32 1.0, %v2156
  %v2158 = vmul.f32 %v2146, %v1900
  %v2159 = vmul.f32 %v2137, %v2149
  %v2160 = vadd.f32 %v2158, %v2159
  %v2161 = vtanh.pop %v2160
  %v2162 = vmul.f32 %v2157, %v2161
  %2163 = vst [vmem:[#allocation2] sm:$0x3] %v2162
  %2164 = vst [vmem:[#allocation3] sm:$0x3] %v2160
  %s2165 = scalar_lea.vmem %s4, 14
  %2166 = vst [vmem:[%s2165] sm:$0x3] %v2162
  // Predicated region
  $region22: #{lstm_decode.1} parent=0 // pred_check
    _
  $region23: #{lstm_decode.1} parent=0 // pred_check_branch
    %2168 = sbr.rel (0) target = $region25
  $region24: #{lstm_decode.1} parent=0 // pred_region
    _
  $region25: #{lstm_decode.1} parent=0 // pred_fallthru
    _
  // Predicated region
  $region26: #{lstm_decode.1} parent=0 // pred_check
    _
  $region27: #{lstm_decode.1} parent=0 // pred_check_branch
    %2170 = sbr.rel (0) target = $region29
  $region28: #{lstm_decode.1} parent=0 // pred_region
    _
  $region29: #{lstm_decode.1} parent=0 // pred_fallthru
    _

</llo_original>
